<compile_context>
chip_gen: v5e
topology: v5e:2x2
jax: 0.10.0
libtpu: 0.0.40
codegen_flags: <defaults>
</compile_context>

<pallas_src>
import functools

import jax
import jax.numpy as jnp
from jax.experimental import pallas as pl
from jax.experimental.pallas import tpu as pltpu

# Layer widths of the autoencoder (encoder then decoder).
DIMS = [520, 256, 128, 64, 32, 64, 128, 256, 520]
N_LAYERS = len(DIMS) - 1          # 8 Linear layers
ENC_LAYERS = 4                    # first 4 belong to the encoder


def _round_up(x, m):
    return ((x + m - 1) // m) * m


def _autoencoder_kernel(x_ref, *refs):
    """refs = (w1, b1, ..., w8, b8, enc_ref, dec_ref)."""
    param_refs = refs[: 2 * N_LAYERS]
    enc_ref, dec_ref = refs[2 * N_LAYERS], refs[2 * N_LAYERS + 1]

    h = x_ref[...].astype(jnp.float32)

    for layer in range(N_LAYERS):
        w_ref = param_refs[2 * layer]          # bf16 weights
        b_ref = param_refs[2 * layer + 1]      # f32 bias
        # bf16 operands on the MXU, f32 accumulation.
        h = jnp.dot(h.astype(jnp.bfloat16), w_ref[...],
                    preferred_element_type=jnp.float32) + b_ref[...]
        # Layers 0..2 (encoder) and 4..6 (decoder) are followed by Tanh;
        # layer 3 (encoder output) and layer 7 (decoder output) are not.
        if layer not in (ENC_LAYERS - 1, N_LAYERS - 1):
            h = jnp.tanh(h)                    # f32 tanh: native EUP path
        if layer == ENC_LAYERS - 1:
            enc_ref[...] = h.astype(enc_ref.dtype)

    dec_ref[...] = h.astype(dec_ref.dtype)


@functools.partial(jax.jit, static_argnames=("block_b",))
def autoencoder_forward(x, params, *, block_b=256):
    """Fused forward pass. Returns (encoded, decoded) like the PyTorch module."""
    B, D_in = x.shape
    assert D_in == DIMS[0]

    # Shrink the tile for small batches; pad ragged batches up to a tile
    # multiple (padded rows are independent and sliced off afterwards).
    block_b_eff = min(block_b, _round_up(B, 8))
    padded_B = _round_up(B, block_b_eff)
    if padded_B != B:
        x = jnp.pad(x, ((0, padded_B - B), (0, 0)))

    grid = (padded_B // block_b_eff,)

    # x tiled over batch; weights/biases fully resident (same block every step).
    in_specs = [pl.BlockSpec((block_b_eff, DIMS[0]), lambda i: (i, 0))]
    for layer in range(N_LAYERS):
        d_in, d_out = DIMS[layer], DIMS[layer + 1]
        in_specs.append(pl.BlockSpec((d_in, d_out), lambda i: (0, 0)))   # W
        in_specs.append(pl.BlockSpec((1, d_out), lambda i: (0, 0)))      # b

    out_specs = (
        pl.BlockSpec((block_b_eff, DIMS[ENC_LAYERS]), lambda i: (i, 0)),  # encoded
        pl.BlockSpec((block_b_eff, DIMS[-1]), lambda i: (i, 0)),          # decoded
    )
    out_shape = (
        jax.ShapeDtypeStruct((padded_B, DIMS[ENC_LAYERS]), x.dtype),
        jax.ShapeDtypeStruct((padded_B, DIMS[-1]), x.dtype),
    )

    # Ship weights as bf16 (halves HBM/VMEM for the resident params), keep
    # biases in f32 for the f32 bias-add.
    flat_params = []
    for w, b in params:
        flat_params.append(w.astype(jnp.bfloat16))
        flat_params.append(b.astype(jnp.float32))

    # Advisory cost hint for the XLA scheduler.
    mac_per_row = sum(DIMS[i] * DIMS[i + 1] for i in range(N_LAYERS))
    tanh_per_row = sum(DIMS[i + 1] for i in range(N_LAYERS)
                       if i not in (ENC_LAYERS - 1, N_LAYERS - 1))
    w_bytes = sum(DIMS[i] * DIMS[i + 1] for i in range(N_LAYERS)) * 2
    b_bytes = sum(DIMS[i + 1] for i in range(N_LAYERS)) * 4
    io_bytes = padded_B * (DIMS[0] + DIMS[ENC_LAYERS] + DIMS[-1]) * x.dtype.itemsize
    cost = pl.CostEstimate(
        flops=2 * padded_B * mac_per_row,
        transcendentals=padded_B * tanh_per_row,
        bytes_accessed=io_bytes + w_bytes + b_bytes,
    )

    enc, dec = pl.pallas_call(
        _autoencoder_kernel,
        out_shape=out_shape,
        grid_spec=pltpu.PrefetchScalarGridSpec(
            num_scalar_prefetch=0,
            grid=grid,
            in_specs=in_specs,
            out_specs=out_specs,
        ),
        compiler_params=pltpu.CompilerParams(
            dimension_semantics=("parallel",),
            vmem_limit_bytes=48 * 1024 * 1024,
        ),
        cost_estimate=cost,
    )(x, *flat_params)

    return enc[:B], dec[:B]


def init_params(key):
    """Deterministic init mimicking nn.Linear default (uniform +/- 1/sqrt(fan_in))."""
    params = []
    for layer in range(N_LAYERS):
        d_in, d_out = DIMS[layer], DIMS[layer + 1]
        key, kw, kb = jax.random.split(key, 3)
        bound = 1.0 / (d_in ** 0.5)
        w = jax.random.uniform(kw, (d_in, d_out), jnp.float32, -bound, bound)
        b = jax.random.uniform(kb, (1, d_out), jnp.float32, -bound, bound)
        params.append((w, b))
    return params


def reference_forward(x, params):
    """Pure-JAX f32 reference for correctness checking."""
    h = x
    enc = None
    for layer, (w, b) in enumerate(params):
        h = h @ w + b
        if layer not in (ENC_LAYERS - 1, N_LAYERS - 1):
            h = jnp.tanh(h)
        if layer == ENC_LAYERS - 1:
            enc = h
    return enc, h


if __name__ == "__main__":
    key = jax.random.PRNGKey(0)
    key, kx = jax.random.split(key)

    # Small demo batch; intentionally not a multiple of 8 to exercise the
    # padding path.  (Real workloads should use B >= 512 so the default
    # 256-row tile gives >= 2 grid steps for v7x's two TensorCores.)
    B = 50
    x = jax.random.normal(kx, (B, DIMS[0]), jnp.float32)
    params = init_params(key)

    enc, dec = autoencoder_forward(x, params)
    jax.block_until_ready((enc, dec))

    enc_ref, dec_ref = reference_forward(x, params)
    assert enc.shape == (B, DIMS[ENC_LAYERS]) and dec.shape == (B, DIMS[-1])
    assert bool(jnp.all(jnp.isfinite(enc))) and bool(jnp.all(jnp.isfinite(dec)))
    # bf16 matmul datapath (f32 accumulation) -> loosened tolerances vs f32 ref.
    assert jnp.allclose(enc, enc_ref, atol=3e-2, rtol=3e-2), \
        float(jnp.max(jnp.abs(enc - enc_ref)))
    assert jnp.allclose(dec, dec_ref, atol=3e-2, rtol=3e-2), \
        float(jnp.max(jnp.abs(dec - dec_ref)))

    print("KERNEL_OK")
</pallas_src>

<mosaic_0001>
module attributes {stable_mosaic.version = 11 : i64} {
  func.func @_autoencoder_kernel(%arg0: i32, %arg1: memref<56x520xf32, #tpu.memory_space<vmem>>, %arg2: memref<520x256xbf16, #tpu.memory_space<vmem>>, %arg3: memref<1x256xf32, #tpu.memory_space<vmem>>, %arg4: memref<256x128xbf16, #tpu.memory_space<vmem>>, %arg5: memref<1x128xf32, #tpu.memory_space<vmem>>, %arg6: memref<128x64xbf16, #tpu.memory_space<vmem>>, %arg7: memref<1x64xf32, #tpu.memory_space<vmem>>, %arg8: memref<64x32xbf16, #tpu.memory_space<vmem>>, %arg9: memref<1x32xf32, #tpu.memory_space<vmem>>, %arg10: memref<32x64xbf16, #tpu.memory_space<vmem>>, %arg11: memref<1x64xf32, #tpu.memory_space<vmem>>, %arg12: memref<64x128xbf16, #tpu.memory_space<vmem>>, %arg13: memref<1x128xf32, #tpu.memory_space<vmem>>, %arg14: memref<128x256xbf16, #tpu.memory_space<vmem>>, %arg15: memref<1x256xf32, #tpu.memory_space<vmem>>, %arg16: memref<256x520xbf16, #tpu.memory_space<vmem>>, %arg17: memref<1x520xf32, #tpu.memory_space<vmem>>, %arg18: memref<56x32xf32, #tpu.memory_space<vmem>>, %arg19: memref<56x520xf32, #tpu.memory_space<vmem>>) attributes {dimension_semantics = [#tpu.dimension_semantics<parallel>], iteration_bounds = array<i64: 1>, scalar_prefetch = 0 : i64, scratch_operands = 0 : i64, tpu.core_type = #tpu.core_type<tc>, window_params = [{transform_indices = @transform_0, window_bounds = array<i64: 56, 520>}, {pipeline_mode = #tpu.pipeline_mode<synchronous>, transform_indices = @transform_1, window_bounds = array<i64: 520, 256>}, {pipeline_mode = #tpu.pipeline_mode<synchronous>, transform_indices = @transform_2, window_bounds = array<i64: 1, 256>}, {pipeline_mode = #tpu.pipeline_mode<synchronous>, transform_indices = @transform_3, window_bounds = array<i64: 256, 128>}, {pipeline_mode = #tpu.pipeline_mode<synchronous>, transform_indices = @transform_4, window_bounds = array<i64: 1, 128>}, {pipeline_mode = #tpu.pipeline_mode<synchronous>, transform_indices = @transform_5, window_bounds = array<i64: 128, 64>}, {pipeline_mode = #tpu.pipeline_mode<synchronous>, transform_indices = @transform_6, window_bounds = array<i64: 1, 64>}, {pipeline_mode = #tpu.pipeline_mode<synchronous>, transform_indices = @transform_7, window_bounds = array<i64: 64, 32>}, {pipeline_mode = #tpu.pipeline_mode<synchronous>, transform_indices = @transform_8, window_bounds = array<i64: 1, 32>}, {pipeline_mode = #tpu.pipeline_mode<synchronous>, transform_indices = @transform_9, window_bounds = array<i64: 32, 64>}, {pipeline_mode = #tpu.pipeline_mode<synchronous>, transform_indices = @transform_10, window_bounds = array<i64: 1, 64>}, {pipeline_mode = #tpu.pipeline_mode<synchronous>, transform_indices = @transform_11, window_bounds = array<i64: 64, 128>}, {pipeline_mode = #tpu.pipeline_mode<synchronous>, transform_indices = @transform_12, window_bounds = array<i64: 1, 128>}, {pipeline_mode = #tpu.pipeline_mode<synchronous>, transform_indices = @transform_13, window_bounds = array<i64: 128, 256>}, {pipeline_mode = #tpu.pipeline_mode<synchronous>, transform_indices = @transform_14, window_bounds = array<i64: 1, 256>}, {pipeline_mode = #tpu.pipeline_mode<synchronous>, transform_indices = @transform_15, window_bounds = array<i64: 256, 520>}, {pipeline_mode = #tpu.pipeline_mode<synchronous>, transform_indices = @transform_16, window_bounds = array<i64: 1, 520>}, {transform_indices = @transform_17, window_bounds = array<i64: 56, 32>}, {transform_indices = @transform_18, window_bounds = array<i64: 56, 520>}]} {
    %c0 = arith.constant 0 : index
    %c0_0 = arith.constant 0 : index
    %0 = vector.load %arg1[%c0, %c0_0] : memref<56x520xf32, #tpu.memory_space<vmem>>, vector<56x520xf32>
    %1 = arith.truncf %0 : vector<56x520xf32> to vector<56x520xbf16>
    %c0_1 = arith.constant 0 : index
    %c0_2 = arith.constant 0 : index
    %2 = vector.load %arg2[%c0_1, %c0_2] : memref<520x256xbf16, #tpu.memory_space<vmem>>, vector<520x256xbf16>
    %cst = arith.constant dense<0.000000e+00> : vector<56x256xf32>
    %3 = tpu.matmul %1, %2, %cst {dimension_numbers = #tpu.dot_dimension_numbers<[1], [0], [0], [1], [0, 0, 1, 1], [], []>} : vector<56x520xbf16>, vector<520x256xbf16>, vector<56x256xf32> -> vector<56x256xf32>
    %c0_3 = arith.constant 0 : index
    %c0_4 = arith.constant 0 : index
    %4 = vector.load %arg3[%c0_3, %c0_4] : memref<1x256xf32, #tpu.memory_space<vmem>>, vector<1x256xf32>
    %5 = vector.broadcast %4 : vector<1x256xf32> to vector<56x256xf32>
    %6 = arith.addf %3, %5 : vector<56x256xf32>
    %7 = math.tanh %6 : vector<56x256xf32>
    %8 = arith.truncf %7 : vector<56x256xf32> to vector<56x256xbf16>
    %c0_5 = arith.constant 0 : index
    %c0_6 = arith.constant 0 : index
    %9 = vector.load %arg4[%c0_5, %c0_6] : memref<256x128xbf16, #tpu.memory_space<vmem>>, vector<256x128xbf16>
    %cst_7 = arith.constant dense<0.000000e+00> : vector<56x128xf32>
    %10 = tpu.matmul %8, %9, %cst_7 {dimension_numbers = #tpu.dot_dimension_numbers<[1], [0], [0], [1], [0, 0, 1, 1], [], []>} : vector<56x256xbf16>, vector<256x128xbf16>, vector<56x128xf32> -> vector<56x128xf32>
    %c0_8 = arith.constant 0 : index
    %c0_9 = arith.constant 0 : index
    %11 = vector.load %arg5[%c0_8, %c0_9] : memref<1x128xf32, #tpu.memory_space<vmem>>, vector<1x128xf32>
    %12 = vector.broadcast %11 : vector<1x128xf32> to vector<56x128xf32>
    %13 = arith.addf %10, %12 : vector<56x128xf32>
    %14 = math.tanh %13 : vector<56x128xf32>
    %15 = arith.truncf %14 : vector<56x128xf32> to vector<56x128xbf16>
    %c0_10 = arith.constant 0 : index
    %c0_11 = arith.constant 0 : index
    %16 = vector.load %arg6[%c0_10, %c0_11] : memref<128x64xbf16, #tpu.memory_space<vmem>>, vector<128x64xbf16>
    %cst_12 = arith.constant dense<0.000000e+00> : vector<56x64xf32>
    %17 = tpu.matmul %15, %16, %cst_12 {dimension_numbers = #tpu.dot_dimension_numbers<[1], [0], [0], [1], [0, 0, 1, 1], [], []>} : vector<56x128xbf16>, vector<128x64xbf16>, vector<56x64xf32> -> vector<56x64xf32>
    %c0_13 = arith.constant 0 : index
    %c0_14 = arith.constant 0 : index
    %18 = vector.load %arg7[%c0_13, %c0_14] : memref<1x64xf32, #tpu.memory_space<vmem>>, vector<1x64xf32>
    %19 = vector.broadcast %18 : vector<1x64xf32> to vector<56x64xf32>
    %20 = arith.addf %17, %19 : vector<56x64xf32>
    %21 = math.tanh %20 : vector<56x64xf32>
    %22 = arith.truncf %21 : vector<56x64xf32> to vector<56x64xbf16>
    %c0_15 = arith.constant 0 : index
    %c0_16 = arith.constant 0 : index
    %23 = vector.load %arg8[%c0_15, %c0_16] : memref<64x32xbf16, #tpu.memory_space<vmem>>, vector<64x32xbf16>
    %cst_17 = arith.constant dense<0.000000e+00> : vector<56x32xf32>
    %24 = tpu.matmul %22, %23, %cst_17 {dimension_numbers = #tpu.dot_dimension_numbers<[1], [0], [0], [1], [0, 0, 1, 1], [], []>} : vector<56x64xbf16>, vector<64x32xbf16>, vector<56x32xf32> -> vector<56x32xf32>
    %c0_18 = arith.constant 0 : index
    %c0_19 = arith.constant 0 : index
    %25 = vector.load %arg9[%c0_18, %c0_19] : memref<1x32xf32, #tpu.memory_space<vmem>>, vector<1x32xf32>
    %26 = vector.broadcast %25 : vector<1x32xf32> to vector<56x32xf32>
    %27 = arith.addf %24, %26 : vector<56x32xf32>
    %c0_20 = arith.constant 0 : index
    %c0_21 = arith.constant 0 : index
    %28 = vector.load %arg18[%c0_20, %c0_21] : memref<56x32xf32, #tpu.memory_space<vmem>>, vector<56x32xf32>
    tpu.vector_store %arg18[%c0_20, %c0_21], %27 {strides = array<i32>} : memref<56x32xf32, #tpu.memory_space<vmem>>, vector<56x32xf32>,
    %29 = arith.truncf %27 : vector<56x32xf32> to vector<56x32xbf16>
    %c0_22 = arith.constant 0 : index
    %c0_23 = arith.constant 0 : index
    %30 = vector.load %arg10[%c0_22, %c0_23] : memref<32x64xbf16, #tpu.memory_space<vmem>>, vector<32x64xbf16>
    %cst_24 = arith.constant dense<0.000000e+00> : vector<56x64xf32>
    %31 = tpu.matmul %29, %30, %cst_24 {dimension_numbers = #tpu.dot_dimension_numbers<[1], [0], [0], [1], [0, 0, 1, 1], [], []>} : vector<56x32xbf16>, vector<32x64xbf16>, vector<56x64xf32> -> vector<56x64xf32>
    %c0_25 = arith.constant 0 : index
    %c0_26 = arith.constant 0 : index
    %32 = vector.load %arg11[%c0_25, %c0_26] : memref<1x64xf32, #tpu.memory_space<vmem>>, vector<1x64xf32>
    %33 = vector.broadcast %32 : vector<1x64xf32> to vector<56x64xf32>
    %34 = arith.addf %31, %33 : vector<56x64xf32>
    %35 = math.tanh %34 : vector<56x64xf32>
    %36 = arith.truncf %35 : vector<56x64xf32> to vector<56x64xbf16>
    %c0_27 = arith.constant 0 : index
    %c0_28 = arith.constant 0 : index
    %37 = vector.load %arg12[%c0_27, %c0_28] : memref<64x128xbf16, #tpu.memory_space<vmem>>, vector<64x128xbf16>
    %cst_29 = arith.constant dense<0.000000e+00> : vector<56x128xf32>
    %38 = tpu.matmul %36, %37, %cst_29 {dimension_numbers = #tpu.dot_dimension_numbers<[1], [0], [0], [1], [0, 0, 1, 1], [], []>} : vector<56x64xbf16>, vector<64x128xbf16>, vector<56x128xf32> -> vector<56x128xf32>
    %c0_30 = arith.constant 0 : index
    %c0_31 = arith.constant 0 : index
    %39 = vector.load %arg13[%c0_30, %c0_31] : memref<1x128xf32, #tpu.memory_space<vmem>>, vector<1x128xf32>
    %40 = vector.broadcast %39 : vector<1x128xf32> to vector<56x128xf32>
    %41 = arith.addf %38, %40 : vector<56x128xf32>
    %42 = math.tanh %41 : vector<56x128xf32>
    %43 = arith.truncf %42 : vector<56x128xf32> to vector<56x128xbf16>
    %c0_32 = arith.constant 0 : index
    %c0_33 = arith.constant 0 : index
    %44 = vector.load %arg14[%c0_32, %c0_33] : memref<128x256xbf16, #tpu.memory_space<vmem>>, vector<128x256xbf16>
    %cst_34 = arith.constant dense<0.000000e+00> : vector<56x256xf32>
    %45 = tpu.matmul %43, %44, %cst_34 {dimension_numbers = #tpu.dot_dimension_numbers<[1], [0], [0], [1], [0, 0, 1, 1], [], []>} : vector<56x128xbf16>, vector<128x256xbf16>, vector<56x256xf32> -> vector<56x256xf32>
    %c0_35 = arith.constant 0 : index
    %c0_36 = arith.constant 0 : index
    %46 = vector.load %arg15[%c0_35, %c0_36] : memref<1x256xf32, #tpu.memory_space<vmem>>, vector<1x256xf32>
    %47 = vector.broadcast %46 : vector<1x256xf32> to vector<56x256xf32>
    %48 = arith.addf %45, %47 : vector<56x256xf32>
    %49 = math.tanh %48 : vector<56x256xf32>
    %50 = arith.truncf %49 : vector<56x256xf32> to vector<56x256xbf16>
    %c0_37 = arith.constant 0 : index
    %c0_38 = arith.constant 0 : index
    %51 = vector.load %arg16[%c0_37, %c0_38] : memref<256x520xbf16, #tpu.memory_space<vmem>>, vector<256x520xbf16>
    %cst_39 = arith.constant dense<0.000000e+00> : vector<56x520xf32>
    %52 = tpu.matmul %50, %51, %cst_39 {dimension_numbers = #tpu.dot_dimension_numbers<[1], [0], [0], [1], [0, 0, 1, 1], [], []>} : vector<56x256xbf16>, vector<256x520xbf16>, vector<56x520xf32> -> vector<56x520xf32>
    %c0_40 = arith.constant 0 : index
    %c0_41 = arith.constant 0 : index
    %53 = vector.load %arg17[%c0_40, %c0_41] : memref<1x520xf32, #tpu.memory_space<vmem>>, vector<1x520xf32>
    %54 = vector.broadcast %53 : vector<1x520xf32> to vector<56x520xf32>
    %55 = arith.addf %52, %54 : vector<56x520xf32>
    %c0_42 = arith.constant 0 : index
    %c0_43 = arith.constant 0 : index
    %56 = vector.load %arg19[%c0_42, %c0_43] : memref<56x520xf32, #tpu.memory_space<vmem>>, vector<56x520xf32>
    tpu.vector_store %arg19[%c0_42, %c0_43], %55 {strides = array<i32>} : memref<56x520xf32, #tpu.memory_space<vmem>>, vector<56x520xf32>,
    return
  }
  func.func @transform_0(%arg0: i32) -> (i32, i32) {
    %c0_i32 = arith.constant 0 : i32
    %c0_i32_0 = arith.constant 0 : i32
    return %arg0, %c0_i32 : i32, i32
  }
  func.func @transform_1(%arg0: i32) -> (i32, i32) {
    %c0_i32 = arith.constant 0 : i32
    %c0_i32_0 = arith.constant 0 : i32
    %c0_i32_1 = arith.constant 0 : i32
    return %c0_i32, %c0_i32_0 : i32, i32
  }
  func.func @transform_2(%arg0: i32) -> (i32, i32) {
    %c0_i32 = arith.constant 0 : i32
    %c0_i32_0 = arith.constant 0 : i32
    %c0_i32_1 = arith.constant 0 : i32
    return %c0_i32, %c0_i32_0 : i32, i32
  }
  func.func @transform_3(%arg0: i32) -> (i32, i32) {
    %c0_i32 = arith.constant 0 : i32
    %c0_i32_0 = arith.constant 0 : i32
    %c0_i32_1 = arith.constant 0 : i32
    return %c0_i32, %c0_i32_0 : i32, i32
  }
  func.func @transform_4(%arg0: i32) -> (i32, i32) {
    %c0_i32 = arith.constant 0 : i32
    %c0_i32_0 = arith.constant 0 : i32
    %c0_i32_1 = arith.constant 0 : i32
    return %c0_i32, %c0_i32_0 : i32, i32
  }
  func.func @transform_5(%arg0: i32) -> (i32, i32) {
    %c0_i32 = arith.constant 0 : i32
    %c0_i32_0 = arith.constant 0 : i32
    %c0_i32_1 = arith.constant 0 : i32
    return %c0_i32, %c0_i32_0 : i32, i32
  }
  func.func @transform_6(%arg0: i32) -> (i32, i32) {
    %c0_i32 = arith.constant 0 : i32
    %c0_i32_0 = arith.constant 0 : i32
    %c0_i32_1 = arith.constant 0 : i32
    return %c0_i32, %c0_i32_0 : i32, i32
  }
  func.func @transform_7(%arg0: i32) -> (i32, i32) {
    %c0_i32 = arith.constant 0 : i32
    %c0_i32_0 = arith.constant 0 : i32
    %c0_i32_1 = arith.constant 0 : i32
    return %c0_i32, %c0_i32_0 : i32, i32
  }
  func.func @transform_8(%arg0: i32) -> (i32, i32) {
    %c0_i32 = arith.constant 0 : i32
    %c0_i32_0 = arith.constant 0 : i32
    %c0_i32_1 = arith.constant 0 : i32
    return %c0_i32, %c0_i32_0 : i32, i32
  }
  func.func @transform_9(%arg0: i32) -> (i32, i32) {
    %c0_i32 = arith.constant 0 : i32
    %c0_i32_0 = arith.constant 0 : i32
    %c0_i32_1 = arith.constant 0 : i32
    return %c0_i32, %c0_i32_0 : i32, i32
  }
  func.func @transform_10(%arg0: i32) -> (i32, i32) {
    %c0_i32 = arith.constant 0 : i32
    %c0_i32_0 = arith.constant 0 : i32
    %c0_i32_1 = arith.constant 0 : i32
    return %c0_i32, %c0_i32_0 : i32, i32
  }
  func.func @transform_11(%arg0: i32) -> (i32, i32) {
    %c0_i32 = arith.constant 0 : i32
    %c0_i32_0 = arith.constant 0 : i32
    %c0_i32_1 = arith.constant 0 : i32
    return %c0_i32, %c0_i32_0 : i32, i32
  }
  func.func @transform_12(%arg0: i32) -> (i32, i32) {
    %c0_i32 = arith.constant 0 : i32
    %c0_i32_0 = arith.constant 0 : i32
    %c0_i32_1 = arith.constant 0 : i32
    return %c0_i32, %c0_i32_0 : i32, i32
  }
  func.func @transform_13(%arg0: i32) -> (i32, i32) {
    %c0_i32 = arith.constant 0 : i32
    %c0_i32_0 = arith.constant 0 : i32
    %c0_i32_1 = arith.constant 0 : i32
    return %c0_i32, %c0_i32_0 : i32, i32
  }
  func.func @transform_14(%arg0: i32) -> (i32, i32) {
    %c0_i32 = arith.constant 0 : i32
    %c0_i32_0 = arith.constant 0 : i32
    %c0_i32_1 = arith.constant 0 : i32
    return %c0_i32, %c0_i32_0 : i32, i32
  }
  func.func @transform_15(%arg0: i32) -> (i32, i32) {
    %c0_i32 = arith.constant 0 : i32
    %c0_i32_0 = arith.constant 0 : i32
    %c0_i32_1 = arith.constant 0 : i32
    return %c0_i32, %c0_i32_0 : i32, i32
  }
  func.func @transform_16(%arg0: i32) -> (i32, i32) {
    %c0_i32 = arith.constant 0 : i32
    %c0_i32_0 = arith.constant 0 : i32
    %c0_i32_1 = arith.constant 0 : i32
    return %c0_i32, %c0_i32_0 : i32, i32
  }
  func.func @transform_17(%arg0: i32) -> (i32, i32) {
    %c0_i32 = arith.constant 0 : i32
    %c0_i32_0 = arith.constant 0 : i32
    return %arg0, %c0_i32 : i32, i32
  }
  func.func @transform_18(%arg0: i32) -> (i32, i32) {
    %c0_i32 = arith.constant 0 : i32
    %c0_i32_0 = arith.constant 0 : i32
    return %arg0, %c0_i32 : i32, i32
  }
}

</mosaic_0001>

<llo_original>
// kernel: autoencoder_forward.1
$region0: #{autoencoder_forward.1}
  #allocation0 [shape = 'u32[]', space=smem, size = 0x4, offset = 0x4, fixed_abs, tag = 'smem constant byte address 0x4 - core index']
  #allocation1 [shape = 'u32[72,128]{1,0:T(1,128)}', space=vmem, size = 0x9000, scoped, tag = 'internal scratch']
  %s0 = inlined_call_operand.vmem [shape: f32[56,520], index: 0, kind: input, shape index: {}]
  %s1 = inlined_call_operand.vmem [shape: bf16[520,256], index: 1, kind: input, shape index: {}]
  %s2 = inlined_call_operand.vmem [shape: f32[1,256], index: 2, kind: input, shape index: {}]
  %s3 = inlined_call_operand.vmem [shape: bf16[256,128], index: 3, kind: input, shape index: {}]
  %s4 = inlined_call_operand.vmem [shape: f32[1,128], index: 4, kind: input, shape index: {}]
  %s5 = inlined_call_operand.vmem [shape: bf16[128,64], index: 5, kind: input, shape index: {}]
  %s6 = inlined_call_operand.vmem [shape: f32[1,64], index: 6, kind: input, shape index: {}]
  %s7 = inlined_call_operand.vmem [shape: bf16[64,32], index: 7, kind: input, shape index: {}]
  %s8 = inlined_call_operand.vmem [shape: f32[1,32], index: 8, kind: input, shape index: {}]
  %s9 = inlined_call_operand.vmem [shape: bf16[32,64], index: 9, kind: input, shape index: {}]
  %s10 = inlined_call_operand.vmem [shape: f32[1,64], index: 10, kind: input, shape index: {}]
  %s11 = inlined_call_operand.vmem [shape: bf16[64,128], index: 11, kind: input, shape index: {}]
  %s12 = inlined_call_operand.vmem [shape: f32[1,128], index: 12, kind: input, shape index: {}]
  %s13 = inlined_call_operand.vmem [shape: bf16[128,256], index: 13, kind: input, shape index: {}]
  %s14 = inlined_call_operand.vmem [shape: f32[1,256], index: 14, kind: input, shape index: {}]
  %s15 = inlined_call_operand.vmem [shape: bf16[256,520], index: 15, kind: input, shape index: {}]
  %s16 = inlined_call_operand.vmem [shape: f32[1,520], index: 16, kind: input, shape index: {}]
  %s17 = inlined_call_operand.vmem [shape: f32[56,32], index: 17, kind: output, shape index: {0}]
  %s18 = inlined_call_operand.hbm [shape: f32[56,520], index: 18, kind: output, shape index: {1}]
  %19 = xla_tuple %s17, %s18
  %s20 = sld [smem:[#allocation0]]
  $region86: #{autoencoder_forward.1} parent=0
    _
  %s22 = ssub.s32 1, %s20
  %s23 = scalar_select 0, %s22, %s20
  $region1: #{autoencoder_forward.1} parent=0
    #allocation2 [shape = 'u8[143360]{0}', space=vmem, size = 0x23000, scoped, tag = 'output window, operand 1, single buffered']
    #allocation3 [shape = 's32[1]{0}', space=sflag, size = 0x4, scoped, tag = 'scoped memory for autoencoder_forward.1']
    %24 = vsyncpa [#allocation3], 0
    // Predicated region
    $region2: #{autoencoder_forward.1} parent=1 // pred_check
      _
    $region3: #{autoencoder_forward.1} parent=1 // pred_check_branch
      %26 = sbr.rel (0) target = $region5
    $region4: #{autoencoder_forward.1} parent=1 // pred_region
      _
    $region5: #{autoencoder_forward.1} parent=1 // pred_fallthru
      _
    // Predicated region
    $region6: #{autoencoder_forward.1} parent=1 // pred_check
      _
    $region7: #{autoencoder_forward.1} parent=1 // pred_check_branch
      %28 = sbr.rel (0) target = $region9
    $region8: #{autoencoder_forward.1} parent=1 // pred_region
      _
    $region9: #{autoencoder_forward.1} parent=1 // pred_fallthru
      _
    // Predicated region
    $region10: #{autoencoder_forward.1} parent=1 // pred_check
      _
    $region11: #{autoencoder_forward.1} parent=1 // pred_check_branch
      %30 = sbr.rel (0) target = $region13
    $region12: #{autoencoder_forward.1} parent=1 // pred_region
      _
    $region13: #{autoencoder_forward.1} parent=1 // pred_fallthru
      _
    // Predicated region
    $region14: #{autoencoder_forward.1} parent=1 // pred_check
      _
    $region15: #{autoencoder_forward.1} parent=1 // pred_check_branch
      %32 = sbr.rel (0) target = $region17
    $region16: #{autoencoder_forward.1} parent=1 // pred_region
      _
    $region17: #{autoencoder_forward.1} parent=1 // pred_fallthru
      _
    // Predicated region
    $region18: #{autoencoder_forward.1} parent=1 // pred_check
      _
    $region19: #{autoencoder_forward.1} parent=1 // pred_check_branch
      %34 = sbr.rel (0) target = $region21
    $region20: #{autoencoder_forward.1} parent=1 // pred_region
      _
    $region21: #{autoencoder_forward.1} parent=1 // pred_fallthru
      _
    // Predicated region
    $region22: #{autoencoder_forward.1} parent=1 // pred_check
      _
    $region23: #{autoencoder_forward.1} parent=1 // pred_check_branch
      %36 = sbr.rel (0) target = $region25
    $region24: #{autoencoder_forward.1} parent=1 // pred_region
      _
    $region25: #{autoencoder_forward.1} parent=1 // pred_fallthru
      _
    // Predicated region
    $region26: #{autoencoder_forward.1} parent=1 // pred_check
      _
    $region27: #{autoencoder_forward.1} parent=1 // pred_check_branch
      %38 = sbr.rel (0) target = $region29
    $region28: #{autoencoder_forward.1} parent=1 // pred_region
      _
    $region29: #{autoencoder_forward.1} parent=1 // pred_fallthru
      _
    // Predicated region
    $region30: #{autoencoder_forward.1} parent=1 // pred_check
      _
    $region31: #{autoencoder_forward.1} parent=1 // pred_check_branch
      %40 = sbr.rel (0) target = $region33
    $region32: #{autoencoder_forward.1} parent=1 // pred_region
      _
    $region33: #{autoencoder_forward.1} parent=1 // pred_fallthru
      _
    // Predicated region
    $region34: #{autoencoder_forward.1} parent=1 // pred_check
      _
    $region35: #{autoencoder_forward.1} parent=1 // pred_check_branch
      %42 = sbr.rel (0) target = $region37
    $region36: #{autoencoder_forward.1} parent=1 // pred_region
      _
    $region37: #{autoencoder_forward.1} parent=1 // pred_fallthru
      _
    // Predicated region
    $region38: #{autoencoder_forward.1} parent=1 // pred_check
      _
    $region39: #{autoencoder_forward.1} parent=1 // pred_check_branch
      %44 = sbr.rel (0) target = $region41
    $region40: #{autoencoder_forward.1} parent=1 // pred_region
      _
    $region41: #{autoencoder_forward.1} parent=1 // pred_fallthru
      _
    // Predicated region
    $region42: #{autoencoder_forward.1} parent=1 // pred_check
      _
    $region43: #{autoencoder_forward.1} parent=1 // pred_check_branch
      %46 = sbr.rel (0) target = $region45
    $region44: #{autoencoder_forward.1} parent=1 // pred_region
      _
    $region45: #{autoencoder_forward.1} parent=1 // pred_fallthru
      _
    // Predicated region
    $region46: #{autoencoder_forward.1} parent=1 // pred_check
      _
    $region47: #{autoencoder_forward.1} parent=1 // pred_check_branch
      %48 = sbr.rel (0) target = $region49
    $region48: #{autoencoder_forward.1} parent=1 // pred_region
      _
    $region49: #{autoencoder_forward.1} parent=1 // pred_fallthru
      _
    // Predicated region
    $region50: #{autoencoder_forward.1} parent=1 // pred_check
      _
    $region51: #{autoencoder_forward.1} parent=1 // pred_check_branch
      %50 = sbr.rel (0) target = $region53
    $region52: #{autoencoder_forward.1} parent=1 // pred_region
      _
    $region53: #{autoencoder_forward.1} parent=1 // pred_fallthru
      _
    // Predicated region
    $region54: #{autoencoder_forward.1} parent=1 // pred_check
      _
    $region55: #{autoencoder_forward.1} parent=1 // pred_check_branch
      %52 = sbr.rel (0) target = $region57
    $region56: #{autoencoder_forward.1} parent=1 // pred_region
      _
    $region57: #{autoencoder_forward.1} parent=1 // pred_fallthru
      _
    // Predicated region
    $region58: #{autoencoder_forward.1} parent=1 // pred_check
      _
    $region59: #{autoencoder_forward.1} parent=1 // pred_check_branch
      %54 = sbr.rel (0) target = $region61
    $region60: #{autoencoder_forward.1} parent=1 // pred_region
      _
    $region61: #{autoencoder_forward.1} parent=1 // pred_fallthru
      _
    // Predicated region
    $region62: #{autoencoder_forward.1} parent=1 // pred_check
      _
    $region63: #{autoencoder_forward.1} parent=1 // pred_check_branch
      %56 = sbr.rel (0) target = $region65
    $region64: #{autoencoder_forward.1} parent=1 // pred_region
      _
    $region65: #{autoencoder_forward.1} parent=1 // pred_fallthru
      _
    // Predicated region
    $region66: #{autoencoder_forward.1} parent=1 // pred_check
      _
    $region67: #{autoencoder_forward.1} parent=1 // pred_check_branch
      %58 = sbr.rel (0) target = $region69
    $region68: #{autoencoder_forward.1} parent=1 // pred_region
      _
    $region69: #{autoencoder_forward.1} parent=1 // pred_fallthru
      _
    %v60 = vld [vmem:[%s0] sm:$0xff]
    %v61 = vld [vmem:[%s0 + $0x8] sm:$0xff]
    %v62 = vld [vmem:[%s0 + $0x10] sm:$0xff]
    %v63 = vld [vmem:[%s0 + $0x18] sm:$0xff]
    %v64 = vld [vmem:[%s0 + $0x20] sm:$0xff]
    %v65 = vld [vmem:[%s0 + $0x28] sm:$0xff]
    %v66 = vld [vmem:[%s0 + $0x30] sm:$0xff]
    %v67 = vld [vmem:[%s0 + $0x38] sm:$0xff]
    %v68 = vld [vmem:[%s0 + $0x40] sm:$0xff]
    %v69 = vld [vmem:[%s0 + $0x48] sm:$0xff]
    %v70 = vld [vmem:[%s0 + $0x50] sm:$0xff]
    %v71 = vld [vmem:[%s0 + $0x58] sm:$0xff]
    %v72 = vld [vmem:[%s0 + $0x60] sm:$0xff]
    %v73 = vld [vmem:[%s0 + $0x68] sm:$0xff]
    %v74 = vld [vmem:[%s0 + $0x70] sm:$0xff]
    %v75 = vld [vmem:[%s0 + $0x78] sm:$0xff]
    %v76 = vld [vmem:[%s0 + $0x80] sm:$0xff]
    %v77 = vld [vmem:[%s0 + $0x88] sm:$0xff]
    %v78 = vld [vmem:[%s0 + $0x90] sm:$0xff]
    %v79 = vld [vmem:[%s0 + $0x98] sm:$0xff]
    %v80 = vld [vmem:[%s0 + $0xa0] sm:$0xff]
    %v81 = vld [vmem:[%s0 + $0xa8] sm:$0xff]
    %v82 = vld [vmem:[%s0 + $0xb0] sm:$0xff]
    %v83 = vld [vmem:[%s0 + $0xb8] sm:$0xff]
    %v84 = vld [vmem:[%s0 + $0xc0] sm:$0xff]
    %v85 = vld [vmem:[%s0 + $0xc8] sm:$0xff]
    %v86 = vld [vmem:[%s0 + $0xd0] sm:$0xff]
    %v87 = vld [vmem:[%s0 + $0xd8] sm:$0xff]
    %v88 = vld [vmem:[%s0 + $0xe0] sm:$0xff]
    %v89 = vld [vmem:[%s0 + $0xe8] sm:$0xff]
    %v90 = vld [vmem:[%s0 + $0xf0] sm:$0xff]
    %v91 = vld [vmem:[%s0 + $0xf8] sm:$0xff]
    %v92 = vld [vmem:[%s0 + $0x100] sm:$0xff]
    %v93 = vld [vmem:[%s0 + $0x108] sm:$0xff]
    %v94 = vld [vmem:[%s0 + $0x110] sm:$0xff]
    %v95 = vpack.c.bf16 %v65, %v60
    %v96 = vpack.c.bf16 %v66, %v61
    %v97 = vpack.c.bf16 %v67, %v62
    %v98 = vpack.c.bf16 %v68, %v63
    %v99 = vpack.c.bf16 %v69, %v64
    %v100 = vpack.c.bf16 %v75, %v70
    %v101 = vpack.c.bf16 %v76, %v71
    %v102 = vpack.c.bf16 %v77, %v72
    %v103 = vpack.c.bf16 %v78, %v73
    %v104 = vpack.c.bf16 %v79, %v74
    %v105 = vpack.c.bf16 %v85, %v80
    %v106 = vpack.c.bf16 %v86, %v81
    %v107 = vpack.c.bf16 %v87, %v82
    %v108 = vpack.c.bf16 %v88, %v83
    %v109 = vpack.c.bf16 %v89, %v84
    %v110 = vpack.c.bf16 %v90, %v90
    %v111 = vpack.c.bf16 %v91, %v91
    %v112 = vpack.c.bf16 %v92, %v92
    %v113 = vpack.c.bf16 %v93, %v93
    %v114 = vpack.c.bf16 %v94, %v94
    %v115 = vld [vmem:[%s1] sm:$0xff]
    %v116 = vld [vmem:[%s1 + $0x8] sm:$0xff]
    %v117 = vld [vmem:[%s1 + $0x10] sm:$0xff]
    %v118 = vld [vmem:[%s1 + $0x18] sm:$0xff]
    %v119 = vld [vmem:[%s1 + $0x20] sm:$0xff]
    %v120 = vld [vmem:[%s1 + $0x28] sm:$0xff]
    %v121 = vld [vmem:[%s1 + $0x30] sm:$0xff]
    %v122 = vld [vmem:[%s1 + $0x38] sm:$0xff]
    %v123 = vld [vmem:[%s1 + $0x40] sm:$0xff]
    %v124 = vld [vmem:[%s1 + $0x48] sm:$0xff]
    %v125 = vld [vmem:[%s1 + $0x50] sm:$0xff]
    %v126 = vld [vmem:[%s1 + $0x58] sm:$0xff]
    %v127 = vld [vmem:[%s1 + $0x60] sm:$0xff]
    %v128 = vld [vmem:[%s1 + $0x68] sm:$0xff]
    %v129 = vld [vmem:[%s1 + $0x70] sm:$0xff]
    %v130 = vld [vmem:[%s1 + $0x78] sm:$0xff]
    %v131 = vld [vmem:[%s1 + $0x80] sm:$0xff]
    %v132 = vld [vmem:[%s1 + $0x88] sm:$0xff]
    %v133 = vld [vmem:[%s1 + $0x90] sm:$0xff]
    %v134 = vld [vmem:[%s1 + $0x98] sm:$0xff]
    %v135 = vld [vmem:[%s1 + $0xa0] sm:$0xff]
    %v136 = vld [vmem:[%s1 + $0xa8] sm:$0xff]
    %v137 = vld [vmem:[%s1 + $0xb0] sm:$0xff]
    %v138 = vld [vmem:[%s1 + $0xb8] sm:$0xff]
    %v139 = vld [vmem:[%s1 + $0xc0] sm:$0xff]
    %v140 = vld [vmem:[%s1 + $0xc8] sm:$0xff]
    %v141 = vld [vmem:[%s1 + $0xd0] sm:$0xff]
    %v142 = vld [vmem:[%s1 + $0xd8] sm:$0xff]
    %v143 = vld [vmem:[%s1 + $0xe0] sm:$0xff]
    %v144 = vld [vmem:[%s1 + $0xe8] sm:$0xff]
    %v145 = vld [vmem:[%s1 + $0xf0] sm:$0xff]
    %v146 = vld [vmem:[%s1 + $0xf8] sm:$0xff]
    %v147 = vld [vmem:[%s1 + $0x100] sm:$0xff]
    %v148 = vld [vmem:[%s1 + $0x108] sm:$0xff]
    %v149 = vld [vmem:[%s1 + $0x110] sm:$0xff]
    %v150 = vld [vmem:[%s1 + $0x118] sm:$0xff]
    %v151 = vld [vmem:[%s1 + $0x120] sm:$0xff]
    %v152 = vld [vmem:[%s1 + $0x128] sm:$0xff]
    %v153 = vld [vmem:[%s1 + $0x130] sm:$0xff]
    %v154 = vld [vmem:[%s1 + $0x138] sm:$0xff]
    %v155 = vld [vmem:[%s1 + $0x140] sm:$0xff]
    %v156 = vld [vmem:[%s1 + $0x148] sm:$0xff]
    %v157 = vld [vmem:[%s1 + $0x150] sm:$0xff]
    %v158 = vld [vmem:[%s1 + $0x158] sm:$0xff]
    %v159 = vld [vmem:[%s1 + $0x160] sm:$0xff]
    %v160 = vld [vmem:[%s1 + $0x168] sm:$0xff]
    %v161 = vld [vmem:[%s1 + $0x170] sm:$0xff]
    %v162 = vld [vmem:[%s1 + $0x178] sm:$0xff]
    %v163 = vld [vmem:[%s1 + $0x180] sm:$0xff]
    %v164 = vld [vmem:[%s1 + $0x188] sm:$0xff]
    %v165 = vld [vmem:[%s1 + $0x190] sm:$0xff]
    %v166 = vld [vmem:[%s1 + $0x198] sm:$0xff]
    %v167 = vld [vmem:[%s1 + $0x1a0] sm:$0xff]
    %v168 = vld [vmem:[%s1 + $0x1a8] sm:$0xff]
    %v169 = vld [vmem:[%s1 + $0x1b0] sm:$0xff]
    %v170 = vld [vmem:[%s1 + $0x1b8] sm:$0xff]
    %v171 = vld [vmem:[%s1 + $0x1c0] sm:$0xff]
    %v172 = vld [vmem:[%s1 + $0x1c8] sm:$0xff]
    %v173 = vld [vmem:[%s1 + $0x1d0] sm:$0xff]
    %v174 = vld [vmem:[%s1 + $0x1d8] sm:$0xff]
    %v175 = vld [vmem:[%s1 + $0x1e0] sm:$0xff]
    %v176 = vld [vmem:[%s1 + $0x1e8] sm:$0xff]
    %v177 = vld [vmem:[%s1 + $0x1f0] sm:$0xff]
    %v178 = vld [vmem:[%s1 + $0x1f8] sm:$0xff]
    %v179 = vld [vmem:[%s1 + $0x200] sm:$0xff]
    %v180 = vld [vmem:[%s2] sm:$0x3]
    %v182 = vperm.slane %v180, 0
    %v183 = vperm.slane %v180, 1
    %v251 = vunpack.c.l.b16 %v115
    %v252 = vunpack.c.h.b16 %v115
    %v253 = vunpack.c.l.b16 %v116
    %v254 = vunpack.c.h.b16 %v116
    %v255 = vunpack.c.l.b16 %v117
    %v256 = vunpack.c.h.b16 %v117
    %v257 = vunpack.c.l.b16 %v118
    %v258 = vunpack.c.h.b16 %v118
    %v259 = vunpack.c.l.b16 %v119
    %v260 = vunpack.c.h.b16 %v119
    %v261 = vunpack.c.l.b16 %v120
    %v262 = vunpack.c.h.b16 %v120
    %v263 = vunpack.c.l.b16 %v121
    %v264 = vunpack.c.h.b16 %v121
    %v265 = vunpack.c.l.b16 %v122
    %v266 = vunpack.c.h.b16 %v122
    %v267 = vunpack.c.l.b16 %v123
    %v268 = vunpack.c.h.b16 %v123
    %v269 = vunpack.c.l.b16 %v124
    %v270 = vunpack.c.h.b16 %v124
    %v271 = vunpack.c.l.b16 %v125
    %v272 = vunpack.c.h.b16 %v125
    %v273 = vunpack.c.l.b16 %v126
    %v274 = vunpack.c.h.b16 %v126
    %v275 = vunpack.c.l.b16 %v127
    %v276 = vunpack.c.h.b16 %v127
    %v277 = vunpack.c.l.b16 %v128
    %v278 = vunpack.c.h.b16 %v128
    %v279 = vunpack.c.l.b16 %v129
    %v280 = vunpack.c.h.b16 %v129
    %v281 = vunpack.c.l.b16 %v130
    %v282 = vunpack.c.h.b16 %v130
    %v283 = vunpack.c.l.b16 %v131
    %v284 = vunpack.c.h.b16 %v131
    %v285 = vunpack.c.l.b16 %v132
    %v286 = vunpack.c.h.b16 %v132
    %v287 = vunpack.c.l.b16 %v133
    %v288 = vunpack.c.h.b16 %v133
    %v289 = vunpack.c.l.b16 %v134
    %v290 = vunpack.c.h.b16 %v134
    %v291 = vunpack.c.l.b16 %v135
    %v292 = vunpack.c.h.b16 %v135
    %v293 = vunpack.c.l.b16 %v136
    %v294 = vunpack.c.h.b16 %v136
    %v295 = vunpack.c.l.b16 %v137
    %v296 = vunpack.c.h.b16 %v137
    %v297 = vunpack.c.l.b16 %v138
    %v298 = vunpack.c.h.b16 %v138
    %v299 = vunpack.c.l.b16 %v139
    %v300 = vunpack.c.h.b16 %v139
    %v301 = vunpack.c.l.b16 %v140
    %v302 = vunpack.c.h.b16 %v140
    %v303 = vunpack.c.l.b16 %v141
    %v304 = vunpack.c.h.b16 %v141
    %v305 = vunpack.c.l.b16 %v142
    %v306 = vunpack.c.h.b16 %v142
    %v307 = vunpack.c.l.b16 %v143
    %v308 = vunpack.c.h.b16 %v143
    %v309 = vunpack.c.l.b16 %v144
    %v310 = vunpack.c.h.b16 %v144
    %v311 = vunpack.c.l.b16 %v145
    %v312 = vunpack.c.h.b16 %v145
    %v313 = vunpack.c.l.b16 %v146
    %v314 = vunpack.c.h.b16 %v146
    %v315 = vunpack.c.l.b16 %v147
    %v316 = vunpack.c.h.b16 %v147
    %v317 = vunpack.c.l.b16 %v148
    %v318 = vunpack.c.h.b16 %v148
    %v319 = vunpack.c.l.b16 %v149
    %v320 = vunpack.c.h.b16 %v149
    %v321 = vunpack.c.l.b16 %v150
    %v322 = vunpack.c.h.b16 %v150
    %v323 = vunpack.c.l.b16 %v151
    %v324 = vunpack.c.h.b16 %v151
    %v325 = vunpack.c.l.b16 %v152
    %v326 = vunpack.c.h.b16 %v152
    %v327 = vunpack.c.l.b16 %v153
    %v328 = vunpack.c.h.b16 %v153
    %v329 = vunpack.c.l.b16 %v154
    %v330 = vunpack.c.h.b16 %v154
    %v331 = vunpack.c.l.b16 %v155
    %v332 = vunpack.c.h.b16 %v155
    %v333 = vunpack.c.l.b16 %v156
    %v334 = vunpack.c.h.b16 %v156
    %v335 = vunpack.c.l.b16 %v157
    %v336 = vunpack.c.h.b16 %v157
    %v337 = vunpack.c.l.b16 %v158
    %v338 = vunpack.c.h.b16 %v158
    %v339 = vunpack.c.l.b16 %v159
    %v340 = vunpack.c.h.b16 %v159
    %v341 = vunpack.c.l.b16 %v160
    %v342 = vunpack.c.h.b16 %v160
    %v343 = vunpack.c.l.b16 %v161
    %v344 = vunpack.c.h.b16 %v161
    %v345 = vunpack.c.l.b16 %v162
    %v346 = vunpack.c.h.b16 %v162
    %v347 = vunpack.c.l.b16 %v163
    %v348 = vunpack.c.h.b16 %v163
    %v349 = vunpack.c.l.b16 %v164
    %v350 = vunpack.c.h.b16 %v164
    %v351 = vunpack.c.l.b16 %v165
    %v352 = vunpack.c.h.b16 %v165
    %v353 = vunpack.c.l.b16 %v166
    %v354 = vunpack.c.h.b16 %v166
    %v355 = vunpack.c.l.b16 %v167
    %v356 = vunpack.c.h.b16 %v167
    %v357 = vunpack.c.l.b16 %v168
    %v358 = vunpack.c.h.b16 %v168
    %v359 = vunpack.c.l.b16 %v169
    %v360 = vunpack.c.h.b16 %v169
    %v361 = vunpack.c.l.b16 %v170
    %v362 = vunpack.c.h.b16 %v170
    %v363 = vunpack.c.l.b16 %v171
    %v364 = vunpack.c.h.b16 %v171
    %v365 = vunpack.c.l.b16 %v172
    %v366 = vunpack.c.h.b16 %v172
    %v367 = vunpack.c.l.b16 %v173
    %v368 = vunpack.c.h.b16 %v173
    %v369 = vunpack.c.l.b16 %v174
    %v370 = vunpack.c.h.b16 %v174
    %v371 = vunpack.c.l.b16 %v175
    %v372 = vunpack.c.h.b16 %v175
    %v373 = vunpack.c.l.b16 %v176
    %v374 = vunpack.c.h.b16 %v176
    %v375 = vunpack.c.l.b16 %v177
    %v376 = vunpack.c.h.b16 %v177
    %v377 = vunpack.c.l.b16 %v178
    %v378 = vunpack.c.h.b16 %v178
    %v379 = vunpack.c.l.b16 %v179
    %v380 = vunpack.c.h.b16 %v179
    %v381 = vpack.c.b16 %v253, %v251
    %v382 = vpack.c.b16 %v254, %v252
    %v383 = vpack.c.b16 %v257, %v255
    %v384 = vpack.c.b16 %v258, %v256
    %v385 = vpack.c.b16 %v261, %v259
    %v386 = vpack.c.b16 %v262, %v260
    %v387 = vpack.c.b16 %v265, %v263
    %v388 = vpack.c.b16 %v266, %v264
    %v389 = vpack.c.b16 %v269, %v267
    %v390 = vpack.c.b16 %v270, %v268
    %v391 = vpack.c.b16 %v273, %v271
    %v392 = vpack.c.b16 %v274, %v272
    %v393 = vpack.c.b16 %v277, %v275
    %v394 = vpack.c.b16 %v278, %v276
    %v395 = vpack.c.b16 %v281, %v279
    %v396 = vpack.c.b16 %v282, %v280
    %v397 = vpack.c.b16 %v285, %v283
    %v398 = vpack.c.b16 %v286, %v284
    %v399 = vpack.c.b16 %v289, %v287
    %v400 = vpack.c.b16 %v290, %v288
    %v401 = vpack.c.b16 %v293, %v291
    %v402 = vpack.c.b16 %v294, %v292
    %v403 = vpack.c.b16 %v297, %v295
    %v404 = vpack.c.b16 %v298, %v296
    %v405 = vpack.c.b16 %v301, %v299
    %v406 = vpack.c.b16 %v302, %v300
    %v407 = vpack.c.b16 %v305, %v303
    %v408 = vpack.c.b16 %v306, %v304
    %v409 = vpack.c.b16 %v309, %v307
    %v410 = vpack.c.b16 %v310, %v308
    %v411 = vpack.c.b16 %v313, %v311
    %v412 = vpack.c.b16 %v314, %v312
    %v413 = vpack.c.b16 %v317, %v315
    %v414 = vpack.c.b16 %v318, %v316
    %v415 = vpack.c.b16 %v321, %v319
    %v416 = vpack.c.b16 %v322, %v320
    %v417 = vpack.c.b16 %v325, %v323
    %v418 = vpack.c.b16 %v326, %v324
    %v419 = vpack.c.b16 %v329, %v327
    %v420 = vpack.c.b16 %v330, %v328
    %v421 = vpack.c.b16 %v333, %v331
    %v422 = vpack.c.b16 %v334, %v332
    %v423 = vpack.c.b16 %v337, %v335
    %v424 = vpack.c.b16 %v338, %v336
    %v425 = vpack.c.b16 %v341, %v339
    %v426 = vpack.c.b16 %v342, %v340
    %v427 = vpack.c.b16 %v345, %v343
    %v428 = vpack.c.b16 %v346, %v344
    %v429 = vpack.c.b16 %v349, %v347
    %v430 = vpack.c.b16 %v350, %v348
    %v431 = vpack.c.b16 %v353, %v351
    %v432 = vpack.c.b16 %v354, %v352
    %v433 = vpack.c.b16 %v357, %v355
    %v434 = vpack.c.b16 %v358, %v356
    %v435 = vpack.c.b16 %v361, %v359
    %v436 = vpack.c.b16 %v362, %v360
    %v437 = vpack.c.b16 %v365, %v363
    %v438 = vpack.c.b16 %v366, %v364
    %v439 = vpack.c.b16 %v369, %v367
    %v440 = vpack.c.b16 %v370, %v368
    %v441 = vpack.c.b16 %v373, %v371
    %v442 = vpack.c.b16 %v374, %v372
    %v443 = vpack.c.b16 %v377, %v375
    %v444 = vpack.c.b16 %v378, %v376
    %v445 = vpack.c.b16 %v379, %v379
    %v446 = vpack.c.b16 %v380, %v380
    %vm511 = vcmask 64512
    %v513 = vsel %vm511, %v99, 0
    %v516 = vsel %vm511, %v104, 0
    %v519 = vsel %vm511, %v109, 0
    %v522 = vsel %vm511, %v114, 0
    %vm524 = vcmask 1043456
    %v526 = vsel %vm524, %v445, 0
    %v529 = vsel %vm524, %v446, 0
    %531 = vmatpush.bf16.msra.mxu0 %v395
    %532 = vmatpush.bf16.msra.mxu0 %v393
    %533 = vmatpush.bf16.msra.mxu0 %v391
    %534 = vmatpush.bf16.msra.mxu0 %v389
    %535 = vmatpush.bf16.msra.mxu0 %v387
    %536 = vmatpush.bf16.msra.mxu0 %v385
    %537 = vmatpush.bf16.msra.mxu0 %v383
    %538 = vmatpush.bf16.msra.mxu0 %v381
    %539 = vmatmul.bf16.gmra.mxu0 %v95
    %v540 = vpop.f32.mrf.mxu0
    %v541 = vadd.f32 %v182, %v540
    %v542 = vpop.f32.mrf.mxu0
    %v543 = vadd.f32 %v182, %v542
    %544 = vmatmul.bf16.gmra.mxu0 %v100
    %v545 = vpop.f32.mrf.mxu0
    %v546 = vadd.f32 %v182, %v545
    %v547 = vpop.f32.mrf.mxu0
    %v548 = vadd.f32 %v182, %v547
    %549 = vmatmul.bf16.gmra.mxu0 %v105
    %v550 = vpop.f32.mrf.mxu0
    %v551 = vadd.f32 %v182, %v550
    %v552 = vpop.f32.mrf.mxu0
    %v553 = vadd.f32 %v182, %v552
    %554 = vmatmul.bf16.gmra.mxu0 %v110
    %v555 = vpop.f32.mrf.mxu0
    %v556 = vadd.f32 %v182, %v555
    %v557 = vpop.f32.mrf.mxu0
    %558 = vdwg.mxu0
    %559 = vmatpush.bf16.msra.mxu0 %v411
    %560 = vmatpush.bf16.msra.mxu0 %v409
    %561 = vmatpush.bf16.msra.mxu0 %v407
    %562 = vmatpush.bf16.msra.mxu0 %v405
    %563 = vmatpush.bf16.msra.mxu0 %v403
    %564 = vmatpush.bf16.msra.mxu0 %v401
    %565 = vmatpush.bf16.msra.mxu0 %v399
    %566 = vmatpush.bf16.msra.mxu0 %v397
    %567 = vmatmul.bf16.gmra.mxu0 %v96
    %v568 = vpop.f32.mrf.mxu0
    %v569 = vadd.f32 %v541, %v568
    %v570 = vpop.f32.mrf.mxu0
    %v571 = vadd.f32 %v543, %v570
    %572 = vmatmul.bf16.gmra.mxu0 %v101
    %v573 = vpop.f32.mrf.mxu0
    %v574 = vadd.f32 %v546, %v573
    %v575 = vpop.f32.mrf.mxu0
    %v576 = vadd.f32 %v548, %v575
    %577 = vmatmul.bf16.gmra.mxu0 %v106
    %v578 = vpop.f32.mrf.mxu0
    %v579 = vadd.f32 %v551, %v578
    %v580 = vpop.f32.mrf.mxu0
    %v581 = vadd.f32 %v553, %v580
    %582 = vmatmul.bf16.gmra.mxu0 %v111
    %v583 = vpop.f32.mrf.mxu0
    %v584 = vadd.f32 %v556, %v583
    %v585 = vpop.f32.mrf.mxu0
    %586 = vdwg.mxu0
    %587 = vmatpush.bf16.msra.mxu0 %v427
    %588 = vmatpush.bf16.msra.mxu0 %v425
    %589 = vmatpush.bf16.msra.mxu0 %v423
    %590 = vmatpush.bf16.msra.mxu0 %v421
    %591 = vmatpush.bf16.msra.mxu0 %v419
    %592 = vmatpush.bf16.msra.mxu0 %v417
    %593 = vmatpush.bf16.msra.mxu0 %v415
    %594 = vmatpush.bf16.msra.mxu0 %v413
    %595 = vmatmul.bf16.gmra.mxu0 %v97
    %v596 = vpop.f32.mrf.mxu0
    %v597 = vadd.f32 %v569, %v596
    %v598 = vpop.f32.mrf.mxu0
    %v599 = vadd.f32 %v571, %v598
    %600 = vmatmul.bf16.gmra.mxu0 %v102
    %v601 = vpop.f32.mrf.mxu0
    %v602 = vadd.f32 %v574, %v601
    %v603 = vpop.f32.mrf.mxu0
    %v604 = vadd.f32 %v576, %v603
    %605 = vmatmul.bf16.gmra.mxu0 %v107
    %v606 = vpop.f32.mrf.mxu0
    %v607 = vadd.f32 %v579, %v606
    %v608 = vpop.f32.mrf.mxu0
    %v609 = vadd.f32 %v581, %v608
    %610 = vmatmul.bf16.gmra.mxu0 %v112
    %v611 = vpop.f32.mrf.mxu0
    %v612 = vadd.f32 %v584, %v611
    %v613 = vpop.f32.mrf.mxu0
    %614 = vdwg.mxu0
    %615 = vmatpush.bf16.msra.mxu0 %v443
    %616 = vmatpush.bf16.msra.mxu0 %v441
    %617 = vmatpush.bf16.msra.mxu0 %v439
    %618 = vmatpush.bf16.msra.mxu0 %v437
    %619 = vmatpush.bf16.msra.mxu0 %v435
    %620 = vmatpush.bf16.msra.mxu0 %v433
    %621 = vmatpush.bf16.msra.mxu0 %v431
    %622 = vmatpush.bf16.msra.mxu0 %v429
    %623 = vmatmul.bf16.gmra.mxu0 %v98
    %v624 = vpop.f32.mrf.mxu0
    %v625 = vadd.f32 %v597, %v624
    %v626 = vpop.f32.mrf.mxu0
    %v627 = vadd.f32 %v599, %v626
    %628 = vmatmul.bf16.gmra.mxu0 %v103
    %v629 = vpop.f32.mrf.mxu0
    %v630 = vadd.f32 %v602, %v629
    %v631 = vpop.f32.mrf.mxu0
    %v632 = vadd.f32 %v604, %v631
    %633 = vmatmul.bf16.gmra.mxu0 %v108
    %v634 = vpop.f32.mrf.mxu0
    %v635 = vadd.f32 %v607, %v634
    %v636 = vpop.f32.mrf.mxu0
    %v637 = vadd.f32 %v609, %v636
    %638 = vmatmul.bf16.gmra.mxu0 %v113
    %v639 = vpop.f32.mrf.mxu0
    %v640 = vadd.f32 %v612, %v639
    %v641 = vpop.f32.mrf.mxu0
    %642 = vdwg.mxu0
    %643 = vmatpush.bf16.msra.mxu0 0
    %644 = vmatpush.bf16.msra.mxu0 0
    %645 = vmatpush.bf16.msra.mxu0 0
    %646 = vmatpush.bf16.msra.mxu0 0
    %647 = vmatpush.bf16.msra.mxu0 0
    %648 = vmatpush.bf16.msra.mxu0 0
    %649 = vmatpush.bf16.msra.mxu0 0
    %650 = vmatpush.bf16.msra.mxu0 %v526
    %651 = vmatmul.bf16.gmra.mxu0 %v513
    %v652 = vpop.f32.mrf.mxu0
    %v653 = vadd.f32 %v625, %v652
    %v654 = vpop.f32.mrf.mxu0
    %v655 = vadd.f32 %v627, %v654
    %656 = vmatmul.bf16.gmra.mxu0 %v516
    %v657 = vpop.f32.mrf.mxu0
    %v658 = vadd.f32 %v630, %v657
    %v659 = vpop.f32.mrf.mxu0
    %v660 = vadd.f32 %v632, %v659
    %661 = vmatmul.bf16.gmra.mxu0 %v519
    %v662 = vpop.f32.mrf.mxu0
    %v663 = vadd.f32 %v635, %v662
    %v664 = vpop.f32.mrf.mxu0
    %v665 = vadd.f32 %v637, %v664
    %666 = vmatmul.bf16.gmra.mxu0 %v522
    %v667 = vpop.f32.mrf.mxu0
    %v668 = vadd.f32 %v640, %v667
    %v669 = vpop.f32.mrf.mxu0
    %670 = vdwg.mxu0
    %671 = vmatpush.bf16.msra.mxu0 %v396
    %672 = vmatpush.bf16.msra.mxu0 %v394
    %673 = vmatpush.bf16.msra.mxu0 %v392
    %674 = vmatpush.bf16.msra.mxu0 %v390
    %675 = vmatpush.bf16.msra.mxu0 %v388
    %676 = vmatpush.bf16.msra.mxu0 %v386
    %677 = vmatpush.bf16.msra.mxu0 %v384
    %678 = vmatpush.bf16.msra.mxu0 %v382
    %679 = vmatmul.bf16.gmra.mxu0 %v95
    %v680 = vpop.f32.mrf.mxu0
    %v681 = vadd.f32 %v183, %v680
    %v682 = vpop.f32.mrf.mxu0
    %v683 = vadd.f32 %v183, %v682
    %684 = vmatmul.bf16.gmra.mxu0 %v100
    %v685 = vpop.f32.mrf.mxu0
    %v686 = vadd.f32 %v183, %v685
    %v687 = vpop.f32.mrf.mxu0
    %v688 = vadd.f32 %v183, %v687
    %689 = vmatmul.bf16.gmra.mxu0 %v105
    %v690 = vpop.f32.mrf.mxu0
    %v691 = vadd.f32 %v183, %v690
    %v692 = vpop.f32.mrf.mxu0
    %v693 = vadd.f32 %v183, %v692
    %694 = vmatmul.bf16.gmra.mxu0 %v110
    %v695 = vpop.f32.mrf.mxu0
    %v696 = vadd.f32 %v183, %v695
    %v697 = vpop.f32.mrf.mxu0
    %698 = vdwg.mxu0
    %699 = vmatpush.bf16.msra.mxu0 %v412
    %700 = vmatpush.bf16.msra.mxu0 %v410
    %701 = vmatpush.bf16.msra.mxu0 %v408
    %702 = vmatpush.bf16.msra.mxu0 %v406
    %703 = vmatpush.bf16.msra.mxu0 %v404
    %704 = vmatpush.bf16.msra.mxu0 %v402
    %705 = vmatpush.bf16.msra.mxu0 %v400
    %706 = vmatpush.bf16.msra.mxu0 %v398
    %707 = vmatmul.bf16.gmra.mxu0 %v96
    %v708 = vpop.f32.mrf.mxu0
    %v709 = vadd.f32 %v681, %v708
    %v710 = vpop.f32.mrf.mxu0
    %v711 = vadd.f32 %v683, %v710
    %712 = vmatmul.bf16.gmra.mxu0 %v101
    %v713 = vpop.f32.mrf.mxu0
    %v714 = vadd.f32 %v686, %v713
    %v715 = vpop.f32.mrf.mxu0
    %v716 = vadd.f32 %v688, %v715
    %717 = vmatmul.bf16.gmra.mxu0 %v106
    %v718 = vpop.f32.mrf.mxu0
    %v719 = vadd.f32 %v691, %v718
    %v720 = vpop.f32.mrf.mxu0
    %v721 = vadd.f32 %v693, %v720
    %722 = vmatmul.bf16.gmra.mxu0 %v111
    %v723 = vpop.f32.mrf.mxu0
    %v724 = vadd.f32 %v696, %v723
    %v725 = vpop.f32.mrf.mxu0
    %726 = vdwg.mxu0
    %727 = vmatpush.bf16.msra.mxu0 %v428
    %728 = vmatpush.bf16.msra.mxu0 %v426
    %729 = vmatpush.bf16.msra.mxu0 %v424
    %730 = vmatpush.bf16.msra.mxu0 %v422
    %731 = vmatpush.bf16.msra.mxu0 %v420
    %732 = vmatpush.bf16.msra.mxu0 %v418
    %733 = vmatpush.bf16.msra.mxu0 %v416
    %734 = vmatpush.bf16.msra.mxu0 %v414
    %735 = vmatmul.bf16.gmra.mxu0 %v97
    %v736 = vpop.f32.mrf.mxu0
    %v737 = vadd.f32 %v709, %v736
    %v738 = vpop.f32.mrf.mxu0
    %v739 = vadd.f32 %v711, %v738
    %740 = vmatmul.bf16.gmra.mxu0 %v102
    %v741 = vpop.f32.mrf.mxu0
    %v742 = vadd.f32 %v714, %v741
    %v743 = vpop.f32.mrf.mxu0
    %v744 = vadd.f32 %v716, %v743
    %745 = vmatmul.bf16.gmra.mxu0 %v107
    %v746 = vpop.f32.mrf.mxu0
    %v747 = vadd.f32 %v719, %v746
    %v748 = vpop.f32.mrf.mxu0
    %v749 = vadd.f32 %v721, %v748
    %750 = vmatmul.bf16.gmra.mxu0 %v112
    %v751 = vpop.f32.mrf.mxu0
    %v752 = vadd.f32 %v724, %v751
    %v753 = vpop.f32.mrf.mxu0
    %754 = vdwg.mxu0
    %755 = vmatpush.bf16.msra.mxu0 %v444
    %756 = vmatpush.bf16.msra.mxu0 %v442
    %757 = vmatpush.bf16.msra.mxu0 %v440
    %758 = vmatpush.bf16.msra.mxu0 %v438
    %759 = vmatpush.bf16.msra.mxu0 %v436
    %760 = vmatpush.bf16.msra.mxu0 %v434
    %761 = vmatpush.bf16.msra.mxu0 %v432
    %762 = vmatpush.bf16.msra.mxu0 %v430
    %763 = vmatmul.bf16.gmra.mxu0 %v98
    %v764 = vpop.f32.mrf.mxu0
    %v765 = vadd.f32 %v737, %v764
    %v766 = vpop.f32.mrf.mxu0
    %v767 = vadd.f32 %v739, %v766
    %768 = vmatmul.bf16.gmra.mxu0 %v103
    %v769 = vpop.f32.mrf.mxu0
    %v770 = vadd.f32 %v742, %v769
    %v771 = vpop.f32.mrf.mxu0
    %v772 = vadd.f32 %v744, %v771
    %773 = vmatmul.bf16.gmra.mxu0 %v108
    %v774 = vpop.f32.mrf.mxu0
    %v775 = vadd.f32 %v747, %v774
    %v776 = vpop.f32.mrf.mxu0
    %v777 = vadd.f32 %v749, %v776
    %778 = vmatmul.bf16.gmra.mxu0 %v113
    %v779 = vpop.f32.mrf.mxu0
    %v780 = vadd.f32 %v752, %v779
    %v781 = vpop.f32.mrf.mxu0
    %782 = vdwg.mxu0
    %783 = vmatpush.bf16.msra.mxu0 0
    %784 = vmatpush.bf16.msra.mxu0 0
    %785 = vmatpush.bf16.msra.mxu0 0
    %786 = vmatpush.bf16.msra.mxu0 0
    %787 = vmatpush.bf16.msra.mxu0 0
    %788 = vmatpush.bf16.msra.mxu0 0
    %789 = vmatpush.bf16.msra.mxu0 0
    %790 = vmatpush.bf16.msra.mxu0 %v529
    %791 = vmatmul.bf16.gmra.mxu0 %v513
    %v792 = vpop.f32.mrf.mxu0
    %v793 = vadd.f32 %v765, %v792
    %v794 = vpop.f32.mrf.mxu0
    %v795 = vadd.f32 %v767, %v794
    %796 = vmatmul.bf16.gmra.mxu0 %v516
    %v797 = vpop.f32.mrf.mxu0
    %v798 = vadd.f32 %v770, %v797
    %v799 = vpop.f32.mrf.mxu0
    %v800 = vadd.f32 %v772, %v799
    %801 = vmatmul.bf16.gmra.mxu0 %v519
    %v802 = vpop.f32.mrf.mxu0
    %v803 = vadd.f32 %v775, %v802
    %v804 = vpop.f32.mrf.mxu0
    %v805 = vadd.f32 %v777, %v804
    %806 = vmatmul.bf16.gmra.mxu0 %v522
    %v807 = vpop.f32.mrf.mxu0
    %v808 = vadd.f32 %v780, %v807
    %v809 = vpop.f32.mrf.mxu0
    %810 = vdwg.mxu0
    %v811 = vtanh.pop %v653
    %v812 = vtanh.pop %v793
    %v813 = vtanh.pop %v655
    %v814 = vtanh.pop %v795
    %v815 = vtanh.pop %v658
    %v816 = vtanh.pop %v798
    %v817 = vtanh.pop %v660
    %v818 = vtanh.pop %v800
    %v819 = vtanh.pop %v663
    %v820 = vtanh.pop %v803
    %v821 = vtanh.pop %v665
    %v822 = vtanh.pop %v805
    %v823 = vtanh.pop %v668
    %v824 = vtanh.pop %v808
    %v825 = vpack.c.bf16 %v813, %v811
    %v826 = vpack.c.bf16 %v814, %v812
    %v827 = vpack.c.bf16 %v817, %v815
    %v828 = vpack.c.bf16 %v818, %v816
    %v829 = vpack.c.bf16 %v821, %v819
    %v830 = vpack.c.bf16 %v822, %v820
    %v831 = vpack.c.bf16 %v823, %v823
    %v832 = vpack.c.bf16 %v824, %v824
    %v833 = vld [vmem:[%s3] sm:$0xf]
    %v834 = vld [vmem:[%s3 + $0x4] sm:$0xf]
    %v835 = vld [vmem:[%s3 + $0x8] sm:$0xf]
    %v836 = vld [vmem:[%s3 + $0xc] sm:$0xf]
    %v837 = vld [vmem:[%s3 + $0x10] sm:$0xf]
    %v838 = vld [vmem:[%s3 + $0x14] sm:$0xf]
    %v839 = vld [vmem:[%s3 + $0x18] sm:$0xf]
    %v840 = vld [vmem:[%s3 + $0x1c] sm:$0xf]
    %v841 = vld [vmem:[%s3 + $0x20] sm:$0xf]
    %v842 = vld [vmem:[%s3 + $0x24] sm:$0xf]
    %v843 = vld [vmem:[%s3 + $0x28] sm:$0xf]
    %v844 = vld [vmem:[%s3 + $0x2c] sm:$0xf]
    %v845 = vld [vmem:[%s3 + $0x30] sm:$0xf]
    %v846 = vld [vmem:[%s3 + $0x34] sm:$0xf]
    %v847 = vld [vmem:[%s3 + $0x38] sm:$0xf]
    %v848 = vld [vmem:[%s3 + $0x3c] sm:$0xf]
    %v849 = vld [vmem:[%s3 + $0x40] sm:$0xf]
    %v850 = vld [vmem:[%s3 + $0x44] sm:$0xf]
    %v851 = vld [vmem:[%s3 + $0x48] sm:$0xf]
    %v852 = vld [vmem:[%s3 + $0x4c] sm:$0xf]
    %v853 = vld [vmem:[%s3 + $0x50] sm:$0xf]
    %v854 = vld [vmem:[%s3 + $0x54] sm:$0xf]
    %v855 = vld [vmem:[%s3 + $0x58] sm:$0xf]
    %v856 = vld [vmem:[%s3 + $0x5c] sm:$0xf]
    %v857 = vld [vmem:[%s3 + $0x60] sm:$0xf]
    %v858 = vld [vmem:[%s3 + $0x64] sm:$0xf]
    %v859 = vld [vmem:[%s3 + $0x68] sm:$0xf]
    %v860 = vld [vmem:[%s3 + $0x6c] sm:$0xf]
    %v861 = vld [vmem:[%s3 + $0x70] sm:$0xf]
    %v862 = vld [vmem:[%s3 + $0x74] sm:$0xf]
    %v863 = vld [vmem:[%s3 + $0x78] sm:$0xf]
    %v864 = vld [vmem:[%s3 + $0x7c] sm:$0xf]
    %v865 = vld [vmem:[%s4] sm:$0x1]
    %v867 = vperm.slane %v865, 0
    %v901 = vunpack.c.l.b16 %v833
    %v902 = vunpack.c.l.b16 %v834
    %v903 = vunpack.c.l.b16 %v835
    %v904 = vunpack.c.l.b16 %v836
    %v905 = vunpack.c.l.b16 %v837
    %v906 = vunpack.c.l.b16 %v838
    %v907 = vunpack.c.l.b16 %v839
    %v908 = vunpack.c.l.b16 %v840
    %v909 = vunpack.c.l.b16 %v841
    %v910 = vunpack.c.l.b16 %v842
    %v911 = vunpack.c.l.b16 %v843
    %v912 = vunpack.c.l.b16 %v844
    %v913 = vunpack.c.l.b16 %v845
    %v914 = vunpack.c.l.b16 %v846
    %v915 = vunpack.c.l.b16 %v847
    %v916 = vunpack.c.l.b16 %v848
    %v917 = vunpack.c.l.b16 %v849
    %v918 = vunpack.c.l.b16 %v850
    %v919 = vunpack.c.l.b16 %v851
    %v920 = vunpack.c.l.b16 %v852
    %v921 = vunpack.c.l.b16 %v853
    %v922 = vunpack.c.l.b16 %v854
    %v923 = vunpack.c.l.b16 %v855
    %v924 = vunpack.c.l.b16 %v856
    %v925 = vunpack.c.l.b16 %v857
    %v926 = vunpack.c.l.b16 %v858
    %v927 = vunpack.c.l.b16 %v859
    %v928 = vunpack.c.l.b16 %v860
    %v929 = vunpack.c.l.b16 %v861
    %v930 = vunpack.c.l.b16 %v862
    %v931 = vunpack.c.l.b16 %v863
    %v932 = vunpack.c.l.b16 %v864
    %v933 = vpack.c.b16 %v902, %v901
    %v934 = vpack.c.b16 %v904, %v903
    %v935 = vpack.c.b16 %v906, %v905
    %v936 = vpack.c.b16 %v908, %v907
    %v937 = vpack.c.b16 %v910, %v909
    %v938 = vpack.c.b16 %v912, %v911
    %v939 = vpack.c.b16 %v914, %v913
    %v940 = vpack.c.b16 %v916, %v915
    %v941 = vpack.c.b16 %v918, %v917
    %v942 = vpack.c.b16 %v920, %v919
    %v943 = vpack.c.b16 %v922, %v921
    %v944 = vpack.c.b16 %v924, %v923
    %v945 = vpack.c.b16 %v926, %v925
    %v946 = vpack.c.b16 %v928, %v927
    %v947 = vpack.c.b16 %v930, %v929
    %v948 = vpack.c.b16 %v932, %v931
    %965 = vmatpush.bf16.msra.mxu0 %v940
    %966 = vmatpush.bf16.msra.mxu0 %v939
    %967 = vmatpush.bf16.msra.mxu0 %v938
    %968 = vmatpush.bf16.msra.mxu0 %v937
    %969 = vmatpush.bf16.msra.mxu0 %v936
    %970 = vmatpush.bf16.msra.mxu0 %v935
    %971 = vmatpush.bf16.msra.mxu0 %v934
    %972 = vmatpush.bf16.msra.mxu0 %v933
    %973 = vmatmul.bf16.gmra.mxu0 %v825
    %v974 = vpop.f32.mrf.mxu0
    %v975 = vadd.f32 %v867, %v974
    %v976 = vpop.f32.mrf.mxu0
    %v977 = vadd.f32 %v867, %v976
    %978 = vmatmul.bf16.gmra.mxu0 %v827
    %v979 = vpop.f32.mrf.mxu0
    %v980 = vadd.f32 %v867, %v979
    %v981 = vpop.f32.mrf.mxu0
    %v982 = vadd.f32 %v867, %v981
    %983 = vmatmul.bf16.gmra.mxu0 %v829
    %v984 = vpop.f32.mrf.mxu0
    %v985 = vadd.f32 %v867, %v984
    %v986 = vpop.f32.mrf.mxu0
    %v987 = vadd.f32 %v867, %v986
    %988 = vmatmul.bf16.gmra.mxu0 %v831
    %v989 = vpop.f32.mrf.mxu0
    %v990 = vadd.f32 %v867, %v989
    %v991 = vpop.f32.mrf.mxu0
    %992 = vdwg.mxu0
    %993 = vmatpush.bf16.msra.mxu0 %v948
    %994 = vmatpush.bf16.msra.mxu0 %v947
    %995 = vmatpush.bf16.msra.mxu0 %v946
    %996 = vmatpush.bf16.msra.mxu0 %v945
    %997 = vmatpush.bf16.msra.mxu0 %v944
    %998 = vmatpush.bf16.msra.mxu0 %v943
    %999 = vmatpush.bf16.msra.mxu0 %v942
    %1000 = vmatpush.bf16.msra.mxu0 %v941
    %1001 = vmatmul.bf16.gmra.mxu0 %v826
    %v1002 = vpop.f32.mrf.mxu0
    %v1003 = vadd.f32 %v975, %v1002
    %v1004 = vpop.f32.mrf.mxu0
    %v1005 = vadd.f32 %v977, %v1004
    %1006 = vmatmul.bf16.gmra.mxu0 %v828
    %v1007 = vpop.f32.mrf.mxu0
    %v1008 = vadd.f32 %v980, %v1007
    %v1009 = vpop.f32.mrf.mxu0
    %v1010 = vadd.f32 %v982, %v1009
    %1011 = vmatmul.bf16.gmra.mxu0 %v830
    %v1012 = vpop.f32.mrf.mxu0
    %v1013 = vadd.f32 %v985, %v1012
    %v1014 = vpop.f32.mrf.mxu0
    %v1015 = vadd.f32 %v987, %v1014
    %1016 = vmatmul.bf16.gmra.mxu0 %v832
    %v1017 = vpop.f32.mrf.mxu0
    %v1018 = vadd.f32 %v990, %v1017
    %v1019 = vpop.f32.mrf.mxu0
    %1020 = vdwg.mxu0
    %v1021 = vtanh.pop %v1003
    %v1022 = vtanh.pop %v1005
    %v1023 = vtanh.pop %v1008
    %v1024 = vtanh.pop %v1010
    %v1025 = vtanh.pop %v1013
    %v1026 = vtanh.pop %v1015
    %v1027 = vtanh.pop %v1018
    %v1028 = vpack.c.bf16 %v1022, %v1021
    %v1029 = vpack.c.bf16 %v1024, %v1023
    %v1030 = vpack.c.bf16 %v1026, %v1025
    %v1031 = vpack.c.bf16 %v1027, %v1027
    %v1032 = vld [vmem:[%s5] sm:$0xf]
    %v1033 = vld [vmem:[%s5 + $0x4] sm:$0xf]
    %v1034 = vld [vmem:[%s5 + $0x8] sm:$0xf]
    %v1035 = vld [vmem:[%s5 + $0xc] sm:$0xf]
    %v1036 = vld [vmem:[%s5 + $0x10] sm:$0xf]
    %v1037 = vld [vmem:[%s5 + $0x14] sm:$0xf]
    %v1038 = vld [vmem:[%s5 + $0x18] sm:$0xf]
    %v1039 = vld [vmem:[%s5 + $0x1c] sm:$0xf]
    %v1040 = vld [vmem:[%s5 + $0x20] sm:$0xf]
    %v1041 = vld [vmem:[%s5 + $0x24] sm:$0xf]
    %v1042 = vld [vmem:[%s5 + $0x28] sm:$0xf]
    %v1043 = vld [vmem:[%s5 + $0x2c] sm:$0xf]
    %v1044 = vld [vmem:[%s5 + $0x30] sm:$0xf]
    %v1045 = vld [vmem:[%s5 + $0x34] sm:$0xf]
    %v1046 = vld [vmem:[%s5 + $0x38] sm:$0xf]
    %v1047 = vld [vmem:[%s5 + $0x3c] sm:$0xf]
    %v1048 = vld [vmem:[%s6] sm:$0x1]
    %v1050 = vperm.slane %v1048, 0
    %v1068 = vunpack.c.l.b16 %v1032
    %v1069 = vunpack.c.l.b16 %v1033
    %v1070 = vunpack.c.l.b16 %v1034
    %v1071 = vunpack.c.l.b16 %v1035
    %v1072 = vunpack.c.l.b16 %v1036
    %v1073 = vunpack.c.l.b16 %v1037
    %v1074 = vunpack.c.l.b16 %v1038
    %v1075 = vunpack.c.l.b16 %v1039
    %v1076 = vunpack.c.l.b16 %v1040
    %v1077 = vunpack.c.l.b16 %v1041
    %v1078 = vunpack.c.l.b16 %v1042
    %v1079 = vunpack.c.l.b16 %v1043
    %v1080 = vunpack.c.l.b16 %v1044
    %v1081 = vunpack.c.l.b16 %v1045
    %v1082 = vunpack.c.l.b16 %v1046
    %v1083 = vunpack.c.l.b16 %v1047
    %v1084 = vpack.c.b16 %v1069, %v1068
    %v1085 = vpack.c.b16 %v1071, %v1070
    %v1086 = vpack.c.b16 %v1073, %v1072
    %v1087 = vpack.c.b16 %v1075, %v1074
    %v1088 = vpack.c.b16 %v1077, %v1076
    %v1089 = vpack.c.b16 %v1079, %v1078
    %v1090 = vpack.c.b16 %v1081, %v1080
    %v1091 = vpack.c.b16 %v1083, %v1082
    %1100 = vmatpush.bf16.msra.mxu0 %v1091
    %1101 = vmatpush.bf16.msra.mxu0 %v1090
    %1102 = vmatpush.bf16.msra.mxu0 %v1089
    %1103 = vmatpush.bf16.msra.mxu0 %v1088
    %1104 = vmatpush.bf16.msra.mxu0 %v1087
    %1105 = vmatpush.bf16.msra.mxu0 %v1086
    %1106 = vmatpush.bf16.msra.mxu0 %v1085
    %1107 = vmatpush.bf16.msra.mxu0 %v1084
    %1108 = vmatmul.bf16.gmra.mxu0 %v1028
    %v1109 = vpop.f32.mrf.mxu0
    %v1110 = vadd.f32 %v1050, %v1109
    %v1111 = vpop.f32.mrf.mxu0
    %v1112 = vadd.f32 %v1050, %v1111
    %1113 = vmatmul.bf16.gmra.mxu0 %v1029
    %v1114 = vpop.f32.mrf.mxu0
    %v1115 = vadd.f32 %v1050, %v1114
    %v1116 = vpop.f32.mrf.mxu0
    %v1117 = vadd.f32 %v1050, %v1116
    %1118 = vmatmul.bf16.gmra.mxu0 %v1030
    %v1119 = vpop.f32.mrf.mxu0
    %v1120 = vadd.f32 %v1050, %v1119
    %v1121 = vpop.f32.mrf.mxu0
    %v1122 = vadd.f32 %v1050, %v1121
    %1123 = vmatmul.bf16.gmra.mxu0 %v1031
    %v1124 = vpop.f32.mrf.mxu0
    %v1125 = vadd.f32 %v1050, %v1124
    %v1126 = vpop.f32.mrf.mxu0
    %1127 = vdwg.mxu0
    %v1128 = vtanh.pop %v1110
    %v1129 = vtanh.pop %v1112
    %v1130 = vtanh.pop %v1115
    %v1131 = vtanh.pop %v1117
    %v1132 = vtanh.pop %v1120
    %v1133 = vtanh.pop %v1122
    %v1134 = vtanh.pop %v1125
    %v1135 = vpack.c.bf16 %v1129, %v1128
    %v1136 = vpack.c.bf16 %v1131, %v1130
    %v1137 = vpack.c.bf16 %v1133, %v1132
    %v1138 = vpack.c.bf16 %v1134, %v1134
    %v1139 = vld [vmem:[%s7] sm:$0xf]
    %v1140 = vld [vmem:[%s7 + $0x4] sm:$0xf]
    %v1141 = vld [vmem:[%s7 + $0x8] sm:$0xf]
    %v1142 = vld [vmem:[%s7 + $0xc] sm:$0xf]
    %v1143 = vld [vmem:[%s7 + $0x10] sm:$0xf]
    %v1144 = vld [vmem:[%s7 + $0x14] sm:$0xf]
    %v1145 = vld [vmem:[%s7 + $0x18] sm:$0xf]
    %v1146 = vld [vmem:[%s7 + $0x1c] sm:$0xf]
    %v1147 = vld [vmem:[%s8] sm:$0x1]
    %v1149 = vperm.slane %v1147, 0
    %v1159 = vunpack.c.l.b16 %v1139
    %v1160 = vunpack.c.l.b16 %v1140
    %v1161 = vunpack.c.l.b16 %v1141
    %v1162 = vunpack.c.l.b16 %v1142
    %v1163 = vunpack.c.l.b16 %v1143
    %v1164 = vunpack.c.l.b16 %v1144
    %v1165 = vunpack.c.l.b16 %v1145
    %v1166 = vunpack.c.l.b16 %v1146
    %v1167 = vpack.c.b16 %v1160, %v1159
    %v1168 = vpack.c.b16 %v1162, %v1161
    %v1169 = vpack.c.b16 %v1164, %v1163
    %v1170 = vpack.c.b16 %v1166, %v1165
    %vm1175 = vcmask 523264
    %v1177 = vsel %vm1175, %v1135, 0
    %v1180 = vsel %vm1175, %v1136, 0
    %v1183 = vsel %vm1175, %v1137, 0
    %v1186 = vsel %vm1175, %v1138, 0
    %1188 = vmatpush.bf16.msra.mxu0 0
    %1189 = vmatpush.bf16.msra.mxu0 0
    %1190 = vmatpush.bf16.msra.mxu0 0
    %1191 = vmatpush.bf16.msra.mxu0 0
    %1192 = vmatpush.bf16.msra.mxu0 %v1170
    %1193 = vmatpush.bf16.msra.mxu0 %v1169
    %1194 = vmatpush.bf16.msra.mxu0 %v1168
    %1195 = vmatpush.bf16.msra.mxu0 %v1167
    %1196 = vmatmul.bf16.gmra.mxu0 %v1177
    %v1197 = vpop.f32.mrf.mxu0
    %v1198 = vadd.f32 %v1149, %v1197
    %v1199 = vpop.f32.mrf.mxu0
    %v1200 = vadd.f32 %v1149, %v1199
    %1201 = vmatmul.bf16.gmra.mxu0 %v1180
    %v1202 = vpop.f32.mrf.mxu0
    %v1203 = vadd.f32 %v1149, %v1202
    %v1204 = vpop.f32.mrf.mxu0
    %v1205 = vadd.f32 %v1149, %v1204
    %1206 = vmatmul.bf16.gmra.mxu0 %v1183
    %v1207 = vpop.f32.mrf.mxu0
    %v1208 = vadd.f32 %v1149, %v1207
    %v1209 = vpop.f32.mrf.mxu0
    %v1210 = vadd.f32 %v1149, %v1209
    %1211 = vmatmul.bf16.gmra.mxu0 %v1186
    %v1212 = vpop.f32.mrf.mxu0
    %v1213 = vadd.f32 %v1149, %v1212
    %v1214 = vpop.f32.mrf.mxu0
    %1215 = vdwg.mxu0
    %vm1216 = vcmask 261120
    %1217 = vst.msk [vmem:[%s17] sm:$0xff] %vm1216, %v1198
    %1218 = vst.msk [vmem:[%s17 + $0x8] sm:$0xff] %vm1216, %v1200
    %1219 = vst.msk [vmem:[%s17 + $0x10] sm:$0xff] %vm1216, %v1203
    %1220 = vst.msk [vmem:[%s17 + $0x18] sm:$0xff] %vm1216, %v1205
    %1221 = vst.msk [vmem:[%s17 + $0x20] sm:$0xff] %vm1216, %v1208
    %1222 = vst.msk [vmem:[%s17 + $0x28] sm:$0xff] %vm1216, %v1210
    %1223 = vst.msk [vmem:[%s17 + $0x30] sm:$0xff] %vm1216, %v1213
    %v1224 = vpack.c.bf16 %v1200, %v1198
    %v1225 = vpack.c.bf16 %v1205, %v1203
    %v1226 = vpack.c.bf16 %v1210, %v1208
    %v1227 = vpack.c.bf16 %v1213, %v1213
    %v1228 = vld [vmem:[%s9] sm:$0xf]
    %v1229 = vld [vmem:[%s9 + $0x4] sm:$0xf]
    %v1230 = vld [vmem:[%s9 + $0x8] sm:$0xf]
    %v1231 = vld [vmem:[%s9 + $0xc] sm:$0xf]
    %v1232 = vld [vmem:[%s10] sm:$0x1]
    %v1234 = vperm.slane %v1232, 0
    %v1240 = vunpack.c.l.b16 %v1228
    %v1241 = vunpack.c.l.b16 %v1229
    %v1242 = vunpack.c.l.b16 %v1230
    %v1243 = vunpack.c.l.b16 %v1231
    %v1244 = vpack.c.b16 %v1241, %v1240
    %v1245 = vpack.c.b16 %v1243, %v1242
    %v1249 = vsel %vm1216, %v1224, 0
    %v1252 = vsel %vm1216, %v1225, 0
    %v1255 = vsel %vm1216, %v1226, 0
    %v1258 = vsel %vm1216, %v1227, 0
    %1260 = vmatpush.bf16.msra.mxu0 0
    %1261 = vmatpush.bf16.msra.mxu0 0
    %1262 = vmatpush.bf16.msra.mxu0 0
    %1263 = vmatpush.bf16.msra.mxu0 0
    %1264 = vmatpush.bf16.msra.mxu0 0
    %1265 = vmatpush.bf16.msra.mxu0 0
    %1266 = vmatpush.bf16.msra.mxu0 %v1245
    %1267 = vmatpush.bf16.msra.mxu0 %v1244
    %1268 = vmatmul.bf16.gmra.mxu0 %v1249
    %v1269 = vpop.f32.mrf.mxu0
    %v1270 = vadd.f32 %v1234, %v1269
    %v1271 = vpop.f32.mrf.mxu0
    %v1272 = vadd.f32 %v1234, %v1271
    %1273 = vmatmul.bf16.gmra.mxu0 %v1252
    %v1274 = vpop.f32.mrf.mxu0
    %v1275 = vadd.f32 %v1234, %v1274
    %v1276 = vpop.f32.mrf.mxu0
    %v1277 = vadd.f32 %v1234, %v1276
    %1278 = vmatmul.bf16.gmra.mxu0 %v1255
    %v1279 = vpop.f32.mrf.mxu0
    %v1280 = vadd.f32 %v1234, %v1279
    %v1281 = vpop.f32.mrf.mxu0
    %v1282 = vadd.f32 %v1234, %v1281
    %1283 = vmatmul.bf16.gmra.mxu0 %v1258
    %v1284 = vpop.f32.mrf.mxu0
    %v1285 = vadd.f32 %v1234, %v1284
    %v1286 = vpop.f32.mrf.mxu0
    %1287 = vdwg.mxu0
    %v1288 = vtanh.pop %v1270
    %v1289 = vtanh.pop %v1272
    %v1290 = vtanh.pop %v1275
    %v1291 = vtanh.pop %v1277
    %v1292 = vtanh.pop %v1280
    %v1293 = vtanh.pop %v1282
    %v1294 = vtanh.pop %v1285
    %v1295 = vpack.c.bf16 %v1289, %v1288
    %v1296 = vpack.c.bf16 %v1291, %v1290
    %v1297 = vpack.c.bf16 %v1293, %v1292
    %v1298 = vpack.c.bf16 %v1294, %v1294
    %v1299 = vld [vmem:[%s11] sm:$0xf]
    %v1300 = vld [vmem:[%s11 + $0x4] sm:$0xf]
    %v1301 = vld [vmem:[%s11 + $0x8] sm:$0xf]
    %v1302 = vld [vmem:[%s11 + $0xc] sm:$0xf]
    %v1303 = vld [vmem:[%s11 + $0x10] sm:$0xf]
    %v1304 = vld [vmem:[%s11 + $0x14] sm:$0xf]
    %v1305 = vld [vmem:[%s11 + $0x18] sm:$0xf]
    %v1306 = vld [vmem:[%s11 + $0x1c] sm:$0xf]
    %v1307 = vld [vmem:[%s12] sm:$0x1]
    %v1309 = vperm.slane %v1307, 0
    %v1319 = vunpack.c.l.b16 %v1299
    %v1320 = vunpack.c.l.b16 %v1300
    %v1321 = vunpack.c.l.b16 %v1301
    %v1322 = vunpack.c.l.b16 %v1302
    %v1323 = vunpack.c.l.b16 %v1303
    %v1324 = vunpack.c.l.b16 %v1304
    %v1325 = vunpack.c.l.b16 %v1305
    %v1326 = vunpack.c.l.b16 %v1306
    %v1327 = vpack.c.b16 %v1320, %v1319
    %v1328 = vpack.c.b16 %v1322, %v1321
    %v1329 = vpack.c.b16 %v1324, %v1323
    %v1330 = vpack.c.b16 %v1326, %v1325
    %v1336 = vsel %vm1175, %v1295, 0
    %v1339 = vsel %vm1175, %v1296, 0
    %v1342 = vsel %vm1175, %v1297, 0
    %v1345 = vsel %vm1175, %v1298, 0
    %1347 = vmatpush.bf16.msra.mxu0 0
    %1348 = vmatpush.bf16.msra.mxu0 0
    %1349 = vmatpush.bf16.msra.mxu0 0
    %1350 = vmatpush.bf16.msra.mxu0 0
    %1351 = vmatpush.bf16.msra.mxu0 %v1330
    %1352 = vmatpush.bf16.msra.mxu0 %v1329
    %1353 = vmatpush.bf16.msra.mxu0 %v1328
    %1354 = vmatpush.bf16.msra.mxu0 %v1327
    %1355 = vmatmul.bf16.gmra.mxu0 %v1336
    %v1356 = vpop.f32.mrf.mxu0
    %v1357 = vadd.f32 %v1309, %v1356
    %v1358 = vpop.f32.mrf.mxu0
    %v1359 = vadd.f32 %v1309, %v1358
    %1360 = vmatmul.bf16.gmra.mxu0 %v1339
    %v1361 = vpop.f32.mrf.mxu0
    %v1362 = vadd.f32 %v1309, %v1361
    %v1363 = vpop.f32.mrf.mxu0
    %v1364 = vadd.f32 %v1309, %v1363
    %1365 = vmatmul.bf16.gmra.mxu0 %v1342
    %v1366 = vpop.f32.mrf.mxu0
    %v1367 = vadd.f32 %v1309, %v1366
    %v1368 = vpop.f32.mrf.mxu0
    %v1369 = vadd.f32 %v1309, %v1368
    %1370 = vmatmul.bf16.gmra.mxu0 %v1345
    %v1371 = vpop.f32.mrf.mxu0
    %v1372 = vadd.f32 %v1309, %v1371
    %v1373 = vpop.f32.mrf.mxu0
    %1374 = vdwg.mxu0
    %v1375 = vtanh.pop %v1357
    %v1376 = vtanh.pop %v1359
    %v1377 = vtanh.pop %v1362
    %v1378 = vtanh.pop %v1364
    %v1379 = vtanh.pop %v1367
    %v1380 = vtanh.pop %v1369
    %v1381 = vtanh.pop %v1372
    %v1382 = vpack.c.bf16 %v1376, %v1375
    %v1383 = vpack.c.bf16 %v1378, %v1377
    %v1384 = vpack.c.bf16 %v1380, %v1379
    %v1385 = vpack.c.bf16 %v1381, %v1381
    %v1386 = vld [vmem:[%s13] sm:$0xff]
    %v1387 = vld [vmem:[%s13 + $0x8] sm:$0xff]
    %v1388 = vld [vmem:[%s13 + $0x10] sm:$0xff]
    %v1389 = vld [vmem:[%s13 + $0x18] sm:$0xff]
    %v1390 = vld [vmem:[%s13 + $0x20] sm:$0xff]
    %v1391 = vld [vmem:[%s13 + $0x28] sm:$0xff]
    %v1392 = vld [vmem:[%s13 + $0x30] sm:$0xff]
    %v1393 = vld [vmem:[%s13 + $0x38] sm:$0xff]
    %v1394 = vld [vmem:[%s13 + $0x40] sm:$0xff]
    %v1395 = vld [vmem:[%s13 + $0x48] sm:$0xff]
    %v1396 = vld [vmem:[%s13 + $0x50] sm:$0xff]
    %v1397 = vld [vmem:[%s13 + $0x58] sm:$0xff]
    %v1398 = vld [vmem:[%s13 + $0x60] sm:$0xff]
    %v1399 = vld [vmem:[%s13 + $0x68] sm:$0xff]
    %v1400 = vld [vmem:[%s13 + $0x70] sm:$0xff]
    %v1401 = vld [vmem:[%s13 + $0x78] sm:$0xff]
    %v1402 = vld [vmem:[%s14] sm:$0x3]
    %v1404 = vperm.slane %v1402, 0
    %v1405 = vperm.slane %v1402, 1
    %v1424 = vunpack.c.l.b16 %v1386
    %v1425 = vunpack.c.h.b16 %v1386
    %v1426 = vunpack.c.l.b16 %v1387
    %v1427 = vunpack.c.h.b16 %v1387
    %v1428 = vunpack.c.l.b16 %v1388
    %v1429 = vunpack.c.h.b16 %v1388
    %v1430 = vunpack.c.l.b16 %v1389
    %v1431 = vunpack.c.h.b16 %v1389
    %v1432 = vunpack.c.l.b16 %v1390
    %v1433 = vunpack.c.h.b16 %v1390
    %v1434 = vunpack.c.l.b16 %v1391
    %v1435 = vunpack.c.h.b16 %v1391
    %v1436 = vunpack.c.l.b16 %v1392
    %v1437 = vunpack.c.h.b16 %v1392
    %v1438 = vunpack.c.l.b16 %v1393
    %v1439 = vunpack.c.h.b16 %v1393
    %v1440 = vunpack.c.l.b16 %v1394
    %v1441 = vunpack.c.h.b16 %v1394
    %v1442 = vunpack.c.l.b16 %v1395
    %v1443 = vunpack.c.h.b16 %v1395
    %v1444 = vunpack.c.l.b16 %v1396
    %v1445 = vunpack.c.h.b16 %v1396
    %v1446 = vunpack.c.l.b16 %v1397
    %v1447 = vunpack.c.h.b16 %v1397
    %v1448 = vunpack.c.l.b16 %v1398
    %v1449 = vunpack.c.h.b16 %v1398
    %v1450 = vunpack.c.l.b16 %v1399
    %v1451 = vunpack.c.h.b16 %v1399
    %v1452 = vunpack.c.l.b16 %v1400
    %v1453 = vunpack.c.h.b16 %v1400
    %v1454 = vunpack.c.l.b16 %v1401
    %v1455 = vunpack.c.h.b16 %v1401
    %v1456 = vpack.c.b16 %v1426, %v1424
    %v1457 = vpack.c.b16 %v1427, %v1425
    %v1458 = vpack.c.b16 %v1430, %v1428
    %v1459 = vpack.c.b16 %v1431, %v1429
    %v1460 = vpack.c.b16 %v1434, %v1432
    %v1461 = vpack.c.b16 %v1435, %v1433
    %v1462 = vpack.c.b16 %v1438, %v1436
    %v1463 = vpack.c.b16 %v1439, %v1437
    %v1464 = vpack.c.b16 %v1442, %v1440
    %v1465 = vpack.c.b16 %v1443, %v1441
    %v1466 = vpack.c.b16 %v1446, %v1444
    %v1467 = vpack.c.b16 %v1447, %v1445
    %v1468 = vpack.c.b16 %v1450, %v1448
    %v1469 = vpack.c.b16 %v1451, %v1449
    %v1470 = vpack.c.b16 %v1454, %v1452
    %v1471 = vpack.c.b16 %v1455, %v1453
    %1488 = vmatpush.bf16.msra.mxu0 %v1470
    %1489 = vmatpush.bf16.msra.mxu0 %v1468
    %1490 = vmatpush.bf16.msra.mxu0 %v1466
    %1491 = vmatpush.bf16.msra.mxu0 %v1464
    %1492 = vmatpush.bf16.msra.mxu0 %v1462
    %1493 = vmatpush.bf16.msra.mxu0 %v1460
    %1494 = vmatpush.bf16.msra.mxu0 %v1458
    %1495 = vmatpush.bf16.msra.mxu0 %v1456
    %1496 = vmatmul.bf16.gmra.mxu0 %v1382
    %v1497 = vpop.f32.mrf.mxu0
    %v1498 = vadd.f32 %v1404, %v1497
    %v1499 = vpop.f32.mrf.mxu0
    %v1500 = vadd.f32 %v1404, %v1499
    %1501 = vmatmul.bf16.gmra.mxu0 %v1383
    %v1502 = vpop.f32.mrf.mxu0
    %v1503 = vadd.f32 %v1404, %v1502
    %v1504 = vpop.f32.mrf.mxu0
    %v1505 = vadd.f32 %v1404, %v1504
    %1506 = vmatmul.bf16.gmra.mxu0 %v1384
    %v1507 = vpop.f32.mrf.mxu0
    %v1508 = vadd.f32 %v1404, %v1507
    %v1509 = vpop.f32.mrf.mxu0
    %v1510 = vadd.f32 %v1404, %v1509
    %1511 = vmatmul.bf16.gmra.mxu0 %v1385
    %v1512 = vpop.f32.mrf.mxu0
    %v1513 = vadd.f32 %v1404, %v1512
    %v1514 = vpop.f32.mrf.mxu0
    %1515 = vdwg.mxu0
    %1516 = vmatpush.bf16.msra.mxu0 %v1471
    %1517 = vmatpush.bf16.msra.mxu0 %v1469
    %1518 = vmatpush.bf16.msra.mxu0 %v1467
    %1519 = vmatpush.bf16.msra.mxu0 %v1465
    %1520 = vmatpush.bf16.msra.mxu0 %v1463
    %1521 = vmatpush.bf16.msra.mxu0 %v1461
    %1522 = vmatpush.bf16.msra.mxu0 %v1459
    %1523 = vmatpush.bf16.msra.mxu0 %v1457
    %1524 = vmatmul.bf16.gmra.mxu0 %v1382
    %v1525 = vpop.f32.mrf.mxu0
    %v1526 = vadd.f32 %v1405, %v1525
    %v1527 = vpop.f32.mrf.mxu0
    %v1528 = vadd.f32 %v1405, %v1527
    %1529 = vmatmul.bf16.gmra.mxu0 %v1383
    %v1530 = vpop.f32.mrf.mxu0
    %v1531 = vadd.f32 %v1405, %v1530
    %v1532 = vpop.f32.mrf.mxu0
    %v1533 = vadd.f32 %v1405, %v1532
    %1534 = vmatmul.bf16.gmra.mxu0 %v1384
    %v1535 = vpop.f32.mrf.mxu0
    %v1536 = vadd.f32 %v1405, %v1535
    %v1537 = vpop.f32.mrf.mxu0
    %v1538 = vadd.f32 %v1405, %v1537
    %1539 = vmatmul.bf16.gmra.mxu0 %v1385
    %v1540 = vpop.f32.mrf.mxu0
    %v1541 = vadd.f32 %v1405, %v1540
    %v1542 = vpop.f32.mrf.mxu0
    %1543 = vdwg.mxu0
    %v1544 = vtanh.pop %v1498
    %v1545 = vtanh.pop %v1526
    %v1546 = vtanh.pop %v1500
    %v1547 = vtanh.pop %v1528
    %v1548 = vtanh.pop %v1503
    %v1549 = vtanh.pop %v1531
    %v1550 = vtanh.pop %v1505
    %v1551 = vtanh.pop %v1533
    %v1552 = vtanh.pop %v1508
    %v1553 = vtanh.pop %v1536
    %v1554 = vtanh.pop %v1510
    %v1555 = vtanh.pop %v1538
    %v1556 = vtanh.pop %v1513
    %v1557 = vtanh.pop %v1541
    %v1558 = vpack.c.bf16 %v1546, %v1544
    %v1559 = vpack.c.bf16 %v1547, %v1545
    %v1560 = vpack.c.bf16 %v1550, %v1548
    %v1561 = vpack.c.bf16 %v1551, %v1549
    %v1562 = vpack.c.bf16 %v1554, %v1552
    %v1563 = vpack.c.bf16 %v1555, %v1553
    %v1564 = vpack.c.bf16 %v1556, %v1556
    %v1565 = vpack.c.bf16 %v1557, %v1557
    %v1566 = vld [vmem:[%s15] sm:$0xff]
    %v1567 = vld [vmem:[%s15 + $0x8] sm:$0xff]
    %v1568 = vld [vmem:[%s15 + $0x10] sm:$0xf]
    %v1569 = vld [vmem:[%s15 + $0x14] sm:$0xff]
    %v1570 = vld [vmem:[%s15 + $0x1c] sm:$0xff]
    %v1571 = vld [vmem:[%s15 + $0x24] sm:$0xf]
    %v1572 = vld [vmem:[%s15 + $0x28] sm:$0xff]
    %v1573 = vld [vmem:[%s15 + $0x30] sm:$0xff]
    %v1574 = vld [vmem:[%s15 + $0x38] sm:$0xf]
    %v1575 = vld [vmem:[%s15 + $0x3c] sm:$0xff]
    %v1576 = vld [vmem:[%s15 + $0x44] sm:$0xff]
    %v1577 = vld [vmem:[%s15 + $0x4c] sm:$0xf]
    %v1578 = vld [vmem:[%s15 + $0x50] sm:$0xff]
    %v1579 = vld [vmem:[%s15 + $0x58] sm:$0xff]
    %v1580 = vld [vmem:[%s15 + $0x60] sm:$0xf]
    %v1581 = vld [vmem:[%s15 + $0x64] sm:$0xff]
    %v1582 = vld [vmem:[%s15 + $0x6c] sm:$0xff]
    %v1583 = vld [vmem:[%s15 + $0x74] sm:$0xf]
    %v1584 = vld [vmem:[%s15 + $0x78] sm:$0xff]
    %v1585 = vld [vmem:[%s15 + $0x80] sm:$0xff]
    %v1586 = vld [vmem:[%s15 + $0x88] sm:$0xf]
    %v1587 = vld [vmem:[%s15 + $0x8c] sm:$0xff]
    %v1588 = vld [vmem:[%s15 + $0x94] sm:$0xff]
    %v1589 = vld [vmem:[%s15 + $0x9c] sm:$0xf]
    %v1590 = vld [vmem:[%s15 + $0xa0] sm:$0xff]
    %v1591 = vld [vmem:[%s15 + $0xa8] sm:$0xff]
    %v1592 = vld [vmem:[%s15 + $0xb0] sm:$0xf]
    %v1593 = vld [vmem:[%s15 + $0xb4] sm:$0xff]
    %v1594 = vld [vmem:[%s15 + $0xbc] sm:$0xff]
    %v1595 = vld [vmem:[%s15 + $0xc4] sm:$0xf]
    %v1596 = vld [vmem:[%s15 + $0xc8] sm:$0xff]
    %v1597 = vld [vmem:[%s15 + $0xd0] sm:$0xff]
    %v1598 = vld [vmem:[%s15 + $0xd8] sm:$0xf]
    %v1599 = vld [vmem:[%s15 + $0xdc] sm:$0xff]
    %v1600 = vld [vmem:[%s15 + $0xe4] sm:$0xff]
    %v1601 = vld [vmem:[%s15 + $0xec] sm:$0xf]
    %v1602 = vld [vmem:[%s15 + $0xf0] sm:$0xff]
    %v1603 = vld [vmem:[%s15 + $0xf8] sm:$0xff]
    %v1604 = vld [vmem:[%s15 + $0x100] sm:$0xf]
    %v1605 = vld [vmem:[%s15 + $0x104] sm:$0xff]
    %v1606 = vld [vmem:[%s15 + $0x10c] sm:$0xff]
    %v1607 = vld [vmem:[%s15 + $0x114] sm:$0xf]
    %v1608 = vld [vmem:[%s15 + $0x118] sm:$0xff]
    %v1609 = vld [vmem:[%s15 + $0x120] sm:$0xff]
    %v1610 = vld [vmem:[%s15 + $0x128] sm:$0xf]
    %v1611 = vld [vmem:[%s15 + $0x12c] sm:$0xff]
    %v1612 = vld [vmem:[%s15 + $0x134] sm:$0xff]
    %v1613 = vld [vmem:[%s15 + $0x13c] sm:$0xf]
    %v1614 = vld [vmem:[%s15 + $0x140] sm:$0xff]
    %v1615 = vld [vmem:[%s15 + $0x148] sm:$0xff]
    %v1616 = vld [vmem:[%s15 + $0x150] sm:$0xf]
    %v1617 = vld [vmem:[%s15 + $0x154] sm:$0xff]
    %v1618 = vld [vmem:[%s15 + $0x15c] sm:$0xff]
    %v1619 = vld [vmem:[%s15 + $0x164] sm:$0xf]
    %v1620 = vld [vmem:[%s15 + $0x168] sm:$0xff]
    %v1621 = vld [vmem:[%s15 + $0x170] sm:$0xff]
    %v1622 = vld [vmem:[%s15 + $0x178] sm:$0xf]
    %v1623 = vld [vmem:[%s15 + $0x17c] sm:$0xff]
    %v1624 = vld [vmem:[%s15 + $0x184] sm:$0xff]
    %v1625 = vld [vmem:[%s15 + $0x18c] sm:$0xf]
    %v1626 = vld [vmem:[%s15 + $0x190] sm:$0xff]
    %v1627 = vld [vmem:[%s15 + $0x198] sm:$0xff]
    %v1628 = vld [vmem:[%s15 + $0x1a0] sm:$0xf]
    %v1629 = vld [vmem:[%s15 + $0x1a4] sm:$0xff]
    %v1630 = vld [vmem:[%s15 + $0x1ac] sm:$0xff]
    %v1631 = vld [vmem:[%s15 + $0x1b4] sm:$0xf]
    %v1632 = vld [vmem:[%s15 + $0x1b8] sm:$0xff]
    %v1633 = vld [vmem:[%s15 + $0x1c0] sm:$0xff]
    %v1634 = vld [vmem:[%s15 + $0x1c8] sm:$0xf]
    %v1635 = vld [vmem:[%s15 + $0x1cc] sm:$0xff]
    %v1636 = vld [vmem:[%s15 + $0x1d4] sm:$0xff]
    %v1637 = vld [vmem:[%s15 + $0x1dc] sm:$0xf]
    %v1638 = vld [vmem:[%s15 + $0x1e0] sm:$0xff]
    %v1639 = vld [vmem:[%s15 + $0x1e8] sm:$0xff]
    %v1640 = vld [vmem:[%s15 + $0x1f0] sm:$0xf]
    %v1641 = vld [vmem:[%s15 + $0x1f4] sm:$0xff]
    %v1642 = vld [vmem:[%s15 + $0x1fc] sm:$0xff]
    %v1643 = vld [vmem:[%s15 + $0x204] sm:$0xf]
    %v1644 = vld [vmem:[%s15 + $0x208] sm:$0xff]
    %v1645 = vld [vmem:[%s15 + $0x210] sm:$0xff]
    %v1646 = vld [vmem:[%s15 + $0x218] sm:$0xf]
    %v1647 = vld [vmem:[%s15 + $0x21c] sm:$0xff]
    %v1648 = vld [vmem:[%s15 + $0x224] sm:$0xff]
    %v1649 = vld [vmem:[%s15 + $0x22c] sm:$0xf]
    %v1650 = vld [vmem:[%s15 + $0x230] sm:$0xff]
    %v1651 = vld [vmem:[%s15 + $0x238] sm:$0xff]
    %v1652 = vld [vmem:[%s15 + $0x240] sm:$0xf]
    %v1653 = vld [vmem:[%s15 + $0x244] sm:$0xff]
    %v1654 = vld [vmem:[%s15 + $0x24c] sm:$0xff]
    %v1655 = vld [vmem:[%s15 + $0x254] sm:$0xf]
    %v1656 = vld [vmem:[%s15 + $0x258] sm:$0xff]
    %v1657 = vld [vmem:[%s15 + $0x260] sm:$0xff]
    %v1658 = vld [vmem:[%s15 + $0x268] sm:$0xf]
    %v1659 = vld [vmem:[%s15 + $0x26c] sm:$0xff]
    %v1660 = vld [vmem:[%s15 + $0x274] sm:$0xff]
    %v1661 = vld [vmem:[%s15 + $0x27c] sm:$0xf]
    %v1662 = vld [vmem:[%s16] sm:$0x1f]
    %v1664 = vperm.slane %v1662, 0
    %v1665 = vperm.slane %v1662, 1
    %v1666 = vperm.slane %v1662, 2
    %v1667 = vperm.slane %v1662, 3
    %v1668 = vperm.slane %v1662, 4
    %v1770 = vunpack.c.l.b16 %v1566
    %v1771 = vunpack.c.h.b16 %v1566
    %v1772 = vunpack.c.l.b16 %v1567
    %v1773 = vunpack.c.h.b16 %v1567
    %v1774 = vunpack.c.l.b16 %v1568
    %v1775 = vunpack.c.l.b16 %v1569
    %v1776 = vunpack.c.h.b16 %v1569
    %v1777 = vunpack.c.l.b16 %v1570
    %v1778 = vunpack.c.h.b16 %v1570
    %v1779 = vunpack.c.l.b16 %v1571
    %v1780 = vunpack.c.l.b16 %v1572
    %v1781 = vunpack.c.h.b16 %v1572
    %v1782 = vunpack.c.l.b16 %v1573
    %v1783 = vunpack.c.h.b16 %v1573
    %v1784 = vunpack.c.l.b16 %v1574
    %v1785 = vunpack.c.l.b16 %v1575
    %v1786 = vunpack.c.h.b16 %v1575
    %v1787 = vunpack.c.l.b16 %v1576
    %v1788 = vunpack.c.h.b16 %v1576
    %v1789 = vunpack.c.l.b16 %v1577
    %v1790 = vunpack.c.l.b16 %v1578
    %v1791 = vunpack.c.h.b16 %v1578
    %v1792 = vunpack.c.l.b16 %v1579
    %v1793 = vunpack.c.h.b16 %v1579
    %v1794 = vunpack.c.l.b16 %v1580
    %v1795 = vunpack.c.l.b16 %v1581
    %v1796 = vunpack.c.h.b16 %v1581
    %v1797 = vunpack.c.l.b16 %v1582
    %v1798 = vunpack.c.h.b16 %v1582
    %v1799 = vunpack.c.l.b16 %v1583
    %v1800 = vunpack.c.l.b16 %v1584
    %v1801 = vunpack.c.h.b16 %v1584
    %v1802 = vunpack.c.l.b16 %v1585
    %v1803 = vunpack.c.h.b16 %v1585
    %v1804 = vunpack.c.l.b16 %v1586
    %v1805 = vunpack.c.l.b16 %v1587
    %v1806 = vunpack.c.h.b16 %v1587
    %v1807 = vunpack.c.l.b16 %v1588
    %v1808 = vunpack.c.h.b16 %v1588
    %v1809 = vunpack.c.l.b16 %v1589
    %v1810 = vunpack.c.l.b16 %v1590
    %v1811 = vunpack.c.h.b16 %v1590
    %v1812 = vunpack.c.l.b16 %v1591
    %v1813 = vunpack.c.h.b16 %v1591
    %v1814 = vunpack.c.l.b16 %v1592
    %v1815 = vunpack.c.l.b16 %v1593
    %v1816 = vunpack.c.h.b16 %v1593
    %v1817 = vunpack.c.l.b16 %v1594
    %v1818 = vunpack.c.h.b16 %v1594
    %v1819 = vunpack.c.l.b16 %v1595
    %v1820 = vunpack.c.l.b16 %v1596
    %v1821 = vunpack.c.h.b16 %v1596
    %v1822 = vunpack.c.l.b16 %v1597
    %v1823 = vunpack.c.h.b16 %v1597
    %v1824 = vunpack.c.l.b16 %v1598
    %v1825 = vunpack.c.l.b16 %v1599
    %v1826 = vunpack.c.h.b16 %v1599
    %v1827 = vunpack.c.l.b16 %v1600
    %v1828 = vunpack.c.h.b16 %v1600
    %v1829 = vunpack.c.l.b16 %v1601
    %v1830 = vunpack.c.l.b16 %v1602
    %v1831 = vunpack.c.h.b16 %v1602
    %v1832 = vunpack.c.l.b16 %v1603
    %v1833 = vunpack.c.h.b16 %v1603
    %v1834 = vunpack.c.l.b16 %v1604
    %v1835 = vunpack.c.l.b16 %v1605
    %v1836 = vunpack.c.h.b16 %v1605
    %v1837 = vunpack.c.l.b16 %v1606
    %v1838 = vunpack.c.h.b16 %v1606
    %v1839 = vunpack.c.l.b16 %v1607
    %v1840 = vunpack.c.l.b16 %v1608
    %v1841 = vunpack.c.h.b16 %v1608
    %v1842 = vunpack.c.l.b16 %v1609
    %v1843 = vunpack.c.h.b16 %v1609
    %v1844 = vunpack.c.l.b16 %v1610
    %v1845 = vunpack.c.l.b16 %v1611
    %v1846 = vunpack.c.h.b16 %v1611
    %v1847 = vunpack.c.l.b16 %v1612
    %v1848 = vunpack.c.h.b16 %v1612
    %v1849 = vunpack.c.l.b16 %v1613
    %v1850 = vunpack.c.l.b16 %v1614
    %v1851 = vunpack.c.h.b16 %v1614
    %v1852 = vunpack.c.l.b16 %v1615
    %v1853 = vunpack.c.h.b16 %v1615
    %v1854 = vunpack.c.l.b16 %v1616
    %v1855 = vunpack.c.l.b16 %v1617
    %v1856 = vunpack.c.h.b16 %v1617
    %v1857 = vunpack.c.l.b16 %v1618
    %v1858 = vunpack.c.h.b16 %v1618
    %v1859 = vunpack.c.l.b16 %v1619
    %v1860 = vunpack.c.l.b16 %v1620
    %v1861 = vunpack.c.h.b16 %v1620
    %v1862 = vunpack.c.l.b16 %v1621
    %v1863 = vunpack.c.h.b16 %v1621
    %v1864 = vunpack.c.l.b16 %v1622
    %v1865 = vunpack.c.l.b16 %v1623
    %v1866 = vunpack.c.h.b16 %v1623
    %v1867 = vunpack.c.l.b16 %v1624
    %v1868 = vunpack.c.h.b16 %v1624
    %v1869 = vunpack.c.l.b16 %v1625
    %v1870 = vunpack.c.l.b16 %v1626
    %v1871 = vunpack.c.h.b16 %v1626
    %v1872 = vunpack.c.l.b16 %v1627
    %v1873 = vunpack.c.h.b16 %v1627
    %v1874 = vunpack.c.l.b16 %v1628
    %v1875 = vunpack.c.l.b16 %v1629
    %v1876 = vunpack.c.h.b16 %v1629
    %v1877 = vunpack.c.l.b16 %v1630
    %v1878 = vunpack.c.h.b16 %v1630
    %v1879 = vunpack.c.l.b16 %v1631
    %v1880 = vunpack.c.l.b16 %v1632
    %v1881 = vunpack.c.h.b16 %v1632
    %v1882 = vunpack.c.l.b16 %v1633
    %v1883 = vunpack.c.h.b16 %v1633
    %v1884 = vunpack.c.l.b16 %v1634
    %v1885 = vunpack.c.l.b16 %v1635
    %v1886 = vunpack.c.h.b16 %v1635
    %v1887 = vunpack.c.l.b16 %v1636
    %v1888 = vunpack.c.h.b16 %v1636
    %v1889 = vunpack.c.l.b16 %v1637
    %v1890 = vunpack.c.l.b16 %v1638
    %v1891 = vunpack.c.h.b16 %v1638
    %v1892 = vunpack.c.l.b16 %v1639
    %v1893 = vunpack.c.h.b16 %v1639
    %v1894 = vunpack.c.l.b16 %v1640
    %v1895 = vunpack.c.l.b16 %v1641
    %v1896 = vunpack.c.h.b16 %v1641
    %v1897 = vunpack.c.l.b16 %v1642
    %v1898 = vunpack.c.h.b16 %v1642
    %v1899 = vunpack.c.l.b16 %v1643
    %v1900 = vunpack.c.l.b16 %v1644
    %v1901 = vunpack.c.h.b16 %v1644
    %v1902 = vunpack.c.l.b16 %v1645
    %v1903 = vunpack.c.h.b16 %v1645
    %v1904 = vunpack.c.l.b16 %v1646
    %v1905 = vunpack.c.l.b16 %v1647
    %v1906 = vunpack.c.h.b16 %v1647
    %v1907 = vunpack.c.l.b16 %v1648
    %v1908 = vunpack.c.h.b16 %v1648
    %v1909 = vunpack.c.l.b16 %v1649
    %v1910 = vunpack.c.l.b16 %v1650
    %v1911 = vunpack.c.h.b16 %v1650
    %v1912 = vunpack.c.l.b16 %v1651
    %v1913 = vunpack.c.h.b16 %v1651
    %v1914 = vunpack.c.l.b16 %v1652
    %v1915 = vunpack.c.l.b16 %v1653
    %v1916 = vunpack.c.h.b16 %v1653
    %v1917 = vunpack.c.l.b16 %v1654
    %v1918 = vunpack.c.h.b16 %v1654
    %v1919 = vunpack.c.l.b16 %v1655
    %v1920 = vunpack.c.l.b16 %v1656
    %v1921 = vunpack.c.h.b16 %v1656
    %v1922 = vunpack.c.l.b16 %v1657
    %v1923 = vunpack.c.h.b16 %v1657
    %v1924 = vunpack.c.l.b16 %v1658
    %v1925 = vunpack.c.l.b16 %v1659
    %v1926 = vunpack.c.h.b16 %v1659
    %v1927 = vunpack.c.l.b16 %v1660
    %v1928 = vunpack.c.h.b16 %v1660
    %v1929 = vunpack.c.l.b16 %v1661
    %v1930 = vpack.c.b16 %v1775, %v1770
    %v1931 = vpack.c.b16 %v1776, %v1771
    %v1932 = vpack.c.b16 %v1777, %v1772
    %v1933 = vpack.c.b16 %v1778, %v1773
    %v1934 = vpack.c.b16 %v1779, %v1774
    %v1935 = vpack.c.b16 %v1785, %v1780
    %v1936 = vpack.c.b16 %v1786, %v1781
    %v1937 = vpack.c.b16 %v1787, %v1782
    %v1938 = vpack.c.b16 %v1788, %v1783
    %v1939 = vpack.c.b16 %v1789, %v1784
    %v1940 = vpack.c.b16 %v1795, %v1790
    %v1941 = vpack.c.b16 %v1796, %v1791
    %v1942 = vpack.c.b16 %v1797, %v1792
    %v1943 = vpack.c.b16 %v1798, %v1793
    %v1944 = vpack.c.b16 %v1799, %v1794
    %v1945 = vpack.c.b16 %v1805, %v1800
    %v1946 = vpack.c.b16 %v1806, %v1801
    %v1947 = vpack.c.b16 %v1807, %v1802
    %v1948 = vpack.c.b16 %v1808, %v1803
    %v1949 = vpack.c.b16 %v1809, %v1804
    %v1950 = vpack.c.b16 %v1815, %v1810
    %v1951 = vpack.c.b16 %v1816, %v1811
    %v1952 = vpack.c.b16 %v1817, %v1812
    %v1953 = vpack.c.b16 %v1818, %v1813
    %v1954 = vpack.c.b16 %v1819, %v1814
    %v1955 = vpack.c.b16 %v1825, %v1820
    %v1956 = vpack.c.b16 %v1826, %v1821
    %v1957 = vpack.c.b16 %v1827, %v1822
    %v1958 = vpack.c.b16 %v1828, %v1823
    %v1959 = vpack.c.b16 %v1829, %v1824
    %v1960 = vpack.c.b16 %v1835, %v1830
    %v1961 = vpack.c.b16 %v1836, %v1831
    %v1962 = vpack.c.b16 %v1837, %v1832
    %v1963 = vpack.c.b16 %v1838, %v1833
    %v1964 = vpack.c.b16 %v1839, %v1834
    %v1965 = vpack.c.b16 %v1845, %v1840
    %v1966 = vpack.c.b16 %v1846, %v1841
    %v1967 = vpack.c.b16 %v1847, %v1842
    %v1968 = vpack.c.b16 %v1848, %v1843
    %v1969 = vpack.c.b16 %v1849, %v1844
    %v1970 = vpack.c.b16 %v1855, %v1850
    %v1971 = vpack.c.b16 %v1856, %v1851
    %v1972 = vpack.c.b16 %v1857, %v1852
    %v1973 = vpack.c.b16 %v1858, %v1853
    %v1974 = vpack.c.b16 %v1859, %v1854
    %v1975 = vpack.c.b16 %v1865, %v1860
    %v1976 = vpack.c.b16 %v1866, %v1861
    %v1977 = vpack.c.b16 %v1867, %v1862
    %v1978 = vpack.c.b16 %v1868, %v1863
    %v1979 = vpack.c.b16 %v1869, %v1864
    %v1980 = vpack.c.b16 %v1875, %v1870
    %v1981 = vpack.c.b16 %v1876, %v1871
    %v1982 = vpack.c.b16 %v1877, %v1872
    %v1983 = vpack.c.b16 %v1878, %v1873
    %v1984 = vpack.c.b16 %v1879, %v1874
    %v1985 = vpack.c.b16 %v1885, %v1880
    %v1986 = vpack.c.b16 %v1886, %v1881
    %v1987 = vpack.c.b16 %v1887, %v1882
    %v1988 = vpack.c.b16 %v1888, %v1883
    %v1989 = vpack.c.b16 %v1889, %v1884
    %v1990 = vpack.c.b16 %v1895, %v1890
    %v1991 = vpack.c.b16 %v1896, %v1891
    %v1992 = vpack.c.b16 %v1897, %v1892
    %v1993 = vpack.c.b16 %v1898, %v1893
    %v1994 = vpack.c.b16 %v1899, %v1894
    %v1995 = vpack.c.b16 %v1905, %v1900
    %v1996 = vpack.c.b16 %v1906, %v1901
    %v1997 = vpack.c.b16 %v1907, %v1902
    %v1998 = vpack.c.b16 %v1908, %v1903
    %v1999 = vpack.c.b16 %v1909, %v1904
    %v2000 = vpack.c.b16 %v1915, %v1910
    %v2001 = vpack.c.b16 %v1916, %v1911
    %v2002 = vpack.c.b16 %v1917, %v1912
    %v2003 = vpack.c.b16 %v1918, %v1913
    %v2004 = vpack.c.b16 %v1919, %v1914
    %v2005 = vpack.c.b16 %v1925, %v1920
    %v2006 = vpack.c.b16 %v1926, %v1921
    %v2007 = vpack.c.b16 %v1927, %v1922
    %v2008 = vpack.c.b16 %v1928, %v1923
    %v2009 = vpack.c.b16 %v1929, %v1924
    %2090 = vmatpush.bf16.msra.mxu0 %v1965
    %2091 = vmatpush.bf16.msra.mxu0 %v1960
    %2092 = vmatpush.bf16.msra.mxu0 %v1955
    %2093 = vmatpush.bf16.msra.mxu0 %v1950
    %2094 = vmatpush.bf16.msra.mxu0 %v1945
    %2095 = vmatpush.bf16.msra.mxu0 %v1940
    %2096 = vmatpush.bf16.msra.mxu0 %v1935
    %2097 = vmatpush.bf16.msra.mxu0 %v1930
    %2098 = vmatmul.bf16.gmra.mxu0 %v1558
    %v2099 = vpop.f32.mrf.mxu0
    %v2100 = vadd.f32 %v1664, %v2099
    %v2101 = vpop.f32.mrf.mxu0
    %v2102 = vadd.f32 %v1664, %v2101
    %2103 = vmatmul.bf16.gmra.mxu0 %v1560
    %v2104 = vpop.f32.mrf.mxu0
    %v2105 = vadd.f32 %v1664, %v2104
    %v2106 = vpop.f32.mrf.mxu0
    %v2107 = vadd.f32 %v1664, %v2106
    %2108 = vmatmul.bf16.gmra.mxu0 %v1562
    %v2109 = vpop.f32.mrf.mxu0
    %v2110 = vadd.f32 %v1664, %v2109
    %v2111 = vpop.f32.mrf.mxu0
    %v2112 = vadd.f32 %v1664, %v2111
    %2113 = vmatmul.bf16.gmra.mxu0 %v1564
    %v2114 = vpop.f32.mrf.mxu0
    %v2115 = vadd.f32 %v1664, %v2114
    %v2116 = vpop.f32.mrf.mxu0
    %2117 = vdwg.mxu0
    %2118 = vmatpush.bf16.msra.mxu0 %v2005
    %2119 = vmatpush.bf16.msra.mxu0 %v2000
    %2120 = vmatpush.bf16.msra.mxu0 %v1995
    %2121 = vmatpush.bf16.msra.mxu0 %v1990
    %2122 = vmatpush.bf16.msra.mxu0 %v1985
    %2123 = vmatpush.bf16.msra.mxu0 %v1980
    %2124 = vmatpush.bf16.msra.mxu0 %v1975
    %2125 = vmatpush.bf16.msra.mxu0 %v1970
    %2126 = vmatmul.bf16.gmra.mxu0 %v1559
    %v2127 = vpop.f32.mrf.mxu0
    %v2128 = vadd.f32 %v2100, %v2127
    %v2129 = vpop.f32.mrf.mxu0
    %v2130 = vadd.f32 %v2102, %v2129
    %2131 = vmatmul.bf16.gmra.mxu0 %v1561
    %v2132 = vpop.f32.mrf.mxu0
    %v2133 = vadd.f32 %v2105, %v2132
    %v2134 = vpop.f32.mrf.mxu0
    %v2135 = vadd.f32 %v2107, %v2134
    %2136 = vmatmul.bf16.gmra.mxu0 %v1563
    %v2137 = vpop.f32.mrf.mxu0
    %v2138 = vadd.f32 %v2110, %v2137
    %v2139 = vpop.f32.mrf.mxu0
    %v2140 = vadd.f32 %v2112, %v2139
    %2141 = vmatmul.bf16.gmra.mxu0 %v1565
    %v2142 = vpop.f32.mrf.mxu0
    %v2143 = vadd.f32 %v2115, %v2142
    %v2144 = vpop.f32.mrf.mxu0
    %2145 = vdwg.mxu0
    %2146 = vmatpush.bf16.msra.mxu0 %v1966
    %2147 = vmatpush.bf16.msra.mxu0 %v1961
    %2148 = vmatpush.bf16.msra.mxu0 %v1956
    %2149 = vmatpush.bf16.msra.mxu0 %v1951
    %2150 = vmatpush.bf16.msra.mxu0 %v1946
    %2151 = vmatpush.bf16.msra.mxu0 %v1941
    %2152 = vmatpush.bf16.msra.mxu0 %v1936
    %2153 = vmatpush.bf16.msra.mxu0 %v1931
    %2154 = vmatmul.bf16.gmra.mxu0 %v1558
    %v2155 = vpop.f32.mrf.mxu0
    %v2156 = vadd.f32 %v1665, %v2155
    %v2157 = vpop.f32.mrf.mxu0
    %v2158 = vadd.f32 %v1665, %v2157
    %2159 = vmatmul.bf16.gmra.mxu0 %v1560
    %v2160 = vpop.f32.mrf.mxu0
    %v2161 = vadd.f32 %v1665, %v2160
    %v2162 = vpop.f32.mrf.mxu0
    %v2163 = vadd.f32 %v1665, %v2162
    %2164 = vmatmul.bf16.gmra.mxu0 %v1562
    %v2165 = vpop.f32.mrf.mxu0
    %v2166 = vadd.f32 %v1665, %v2165
    %v2167 = vpop.f32.mrf.mxu0
    %v2168 = vadd.f32 %v1665, %v2167
    %2169 = vmatmul.bf16.gmra.mxu0 %v1564
    %v2170 = vpop.f32.mrf.mxu0
    %v2171 = vadd.f32 %v1665, %v2170
    %v2172 = vpop.f32.mrf.mxu0
    %2173 = vdwg.mxu0
    %2174 = vmatpush.bf16.msra.mxu0 %v2006
    %2175 = vmatpush.bf16.msra.mxu0 %v2001
    %2176 = vmatpush.bf16.msra.mxu0 %v1996
    %2177 = vmatpush.bf16.msra.mxu0 %v1991
    %2178 = vmatpush.bf16.msra.mxu0 %v1986
    %2179 = vmatpush.bf16.msra.mxu0 %v1981
    %2180 = vmatpush.bf16.msra.mxu0 %v1976
    %2181 = vmatpush.bf16.msra.mxu0 %v1971
    %2182 = vmatmul.bf16.gmra.mxu0 %v1559
    %v2183 = vpop.f32.mrf.mxu0
    %v2184 = vadd.f32 %v2156, %v2183
    %v2185 = vpop.f32.mrf.mxu0
    %v2186 = vadd.f32 %v2158, %v2185
    %2187 = vmatmul.bf16.gmra.mxu0 %v1561
    %v2188 = vpop.f32.mrf.mxu0
    %v2189 = vadd.f32 %v2161, %v2188
    %v2190 = vpop.f32.mrf.mxu0
    %v2191 = vadd.f32 %v2163, %v2190
    %2192 = vmatmul.bf16.gmra.mxu0 %v1563
    %v2193 = vpop.f32.mrf.mxu0
    %v2194 = vadd.f32 %v2166, %v2193
    %v2195 = vpop.f32.mrf.mxu0
    %v2196 = vadd.f32 %v2168, %v2195
    %2197 = vmatmul.bf16.gmra.mxu0 %v1565
    %v2198 = vpop.f32.mrf.mxu0
    %v2199 = vadd.f32 %v2171, %v2198
    %v2200 = vpop.f32.mrf.mxu0
    %2201 = vdwg.mxu0
    %2202 = vmatpush.bf16.msra.mxu0 %v1967
    %2203 = vmatpush.bf16.msra.mxu0 %v1962
    %2204 = vmatpush.bf16.msra.mxu0 %v1957
    %2205 = vmatpush.bf16.msra.mxu0 %v1952
    %2206 = vmatpush.bf16.msra.mxu0 %v1947
    %2207 = vmatpush.bf16.msra.mxu0 %v1942
    %2208 = vmatpush.bf16.msra.mxu0 %v1937
    %2209 = vmatpush.bf16.msra.mxu0 %v1932
    %2210 = vmatmul.bf16.gmra.mxu0 %v1558
    %v2211 = vpop.f32.mrf.mxu0
    %v2212 = vadd.f32 %v1666, %v2211
    %v2213 = vpop.f32.mrf.mxu0
    %v2214 = vadd.f32 %v1666, %v2213
    %2215 = vmatmul.bf16.gmra.mxu0 %v1560
    %v2216 = vpop.f32.mrf.mxu0
    %v2217 = vadd.f32 %v1666, %v2216
    %v2218 = vpop.f32.mrf.mxu0
    %v2219 = vadd.f32 %v1666, %v2218
    %2220 = vmatmul.bf16.gmra.mxu0 %v1562
    %v2221 = vpop.f32.mrf.mxu0
    %v2222 = vadd.f32 %v1666, %v2221
    %v2223 = vpop.f32.mrf.mxu0
    %v2224 = vadd.f32 %v1666, %v2223
    %2225 = vmatmul.bf16.gmra.mxu0 %v1564
    %v2226 = vpop.f32.mrf.mxu0
    %v2227 = vadd.f32 %v1666, %v2226
    %v2228 = vpop.f32.mrf.mxu0
    %2229 = vdwg.mxu0
    %2230 = vmatpush.bf16.msra.mxu0 %v2007
    %2231 = vmatpush.bf16.msra.mxu0 %v2002
    %2232 = vmatpush.bf16.msra.mxu0 %v1997
    %2233 = vmatpush.bf16.msra.mxu0 %v1992
    %2234 = vmatpush.bf16.msra.mxu0 %v1987
    %2235 = vmatpush.bf16.msra.mxu0 %v1982
    %2236 = vmatpush.bf16.msra.mxu0 %v1977
    %2237 = vmatpush.bf16.msra.mxu0 %v1972
    %2238 = vmatmul.bf16.gmra.mxu0 %v1559
    %v2239 = vpop.f32.mrf.mxu0
    %v2240 = vadd.f32 %v2212, %v2239
    %v2241 = vpop.f32.mrf.mxu0
    %v2242 = vadd.f32 %v2214, %v2241
    %2243 = vmatmul.bf16.gmra.mxu0 %v1561
    %v2244 = vpop.f32.mrf.mxu0
    %v2245 = vadd.f32 %v2217, %v2244
    %v2246 = vpop.f32.mrf.mxu0
    %v2247 = vadd.f32 %v2219, %v2246
    %2248 = vmatmul.bf16.gmra.mxu0 %v1563
    %v2249 = vpop.f32.mrf.mxu0
    %v2250 = vadd.f32 %v2222, %v2249
    %v2251 = vpop.f32.mrf.mxu0
    %v2252 = vadd.f32 %v2224, %v2251
    %2253 = vmatmul.bf16.gmra.mxu0 %v1565
    %v2254 = vpop.f32.mrf.mxu0
    %v2255 = vadd.f32 %v2227, %v2254
    %v2256 = vpop.f32.mrf.mxu0
    %2257 = vdwg.mxu0
    %2258 = vmatpush.bf16.msra.mxu0 %v1968
    %2259 = vmatpush.bf16.msra.mxu0 %v1963
    %2260 = vmatpush.bf16.msra.mxu0 %v1958
    %2261 = vmatpush.bf16.msra.mxu0 %v1953
    %2262 = vmatpush.bf16.msra.mxu0 %v1948
    %2263 = vmatpush.bf16.msra.mxu0 %v1943
    %2264 = vmatpush.bf16.msra.mxu0 %v1938
    %2265 = vmatpush.bf16.msra.mxu0 %v1933
    %2266 = vmatmul.bf16.gmra.mxu0 %v1558
    %v2267 = vpop.f32.mrf.mxu0
    %v2268 = vadd.f32 %v1667, %v2267
    %v2269 = vpop.f32.mrf.mxu0
    %v2270 = vadd.f32 %v1667, %v2269
    %2271 = vmatmul.bf16.gmra.mxu0 %v1560
    %v2272 = vpop.f32.mrf.mxu0
    %v2273 = vadd.f32 %v1667, %v2272
    %v2274 = vpop.f32.mrf.mxu0
    %v2275 = vadd.f32 %v1667, %v2274
    %2276 = vmatmul.bf16.gmra.mxu0 %v1562
    %v2277 = vpop.f32.mrf.mxu0
    %v2278 = vadd.f32 %v1667, %v2277
    %v2279 = vpop.f32.mrf.mxu0
    %v2280 = vadd.f32 %v1667, %v2279
    %2281 = vmatmul.bf16.gmra.mxu0 %v1564
    %v2282 = vpop.f32.mrf.mxu0
    %v2283 = vadd.f32 %v1667, %v2282
    %v2284 = vpop.f32.mrf.mxu0
    %2285 = vdwg.mxu0
    %2286 = vmatpush.bf16.msra.mxu0 %v2008
    %2287 = vmatpush.bf16.msra.mxu0 %v2003
    %2288 = vmatpush.bf16.msra.mxu0 %v1998
    %2289 = vmatpush.bf16.msra.mxu0 %v1993
    %2290 = vmatpush.bf16.msra.mxu0 %v1988
    %2291 = vmatpush.bf16.msra.mxu0 %v1983
    %2292 = vmatpush.bf16.msra.mxu0 %v1978
    %2293 = vmatpush.bf16.msra.mxu0 %v1973
    %2294 = vmatmul.bf16.gmra.mxu0 %v1559
    %v2295 = vpop.f32.mrf.mxu0
    %v2296 = vadd.f32 %v2268, %v2295
    %v2297 = vpop.f32.mrf.mxu0
    %v2298 = vadd.f32 %v2270, %v2297
    %2299 = vmatmul.bf16.gmra.mxu0 %v1561
    %v2300 = vpop.f32.mrf.mxu0
    %v2301 = vadd.f32 %v2273, %v2300
    %v2302 = vpop.f32.mrf.mxu0
    %v2303 = vadd.f32 %v2275, %v2302
    %2304 = vmatmul.bf16.gmra.mxu0 %v1563
    %v2305 = vpop.f32.mrf.mxu0
    %v2306 = vadd.f32 %v2278, %v2305
    %v2307 = vpop.f32.mrf.mxu0
    %v2308 = vadd.f32 %v2280, %v2307
    %2309 = vmatmul.bf16.gmra.mxu0 %v1565
    %v2310 = vpop.f32.mrf.mxu0
    %v2311 = vadd.f32 %v2283, %v2310
    %v2312 = vpop.f32.mrf.mxu0
    %2313 = vdwg.mxu0
    %2314 = vmatpush.bf16.msra.mxu0 %v1969
    %2315 = vmatpush.bf16.msra.mxu0 %v1964
    %2316 = vmatpush.bf16.msra.mxu0 %v1959
    %2317 = vmatpush.bf16.msra.mxu0 %v1954
    %2318 = vmatpush.bf16.msra.mxu0 %v1949
    %2319 = vmatpush.bf16.msra.mxu0 %v1944
    %2320 = vmatpush.bf16.msra.mxu0 %v1939
    %2321 = vmatpush.bf16.msra.mxu0 %v1934
    %2322 = vmatmul.bf16.gmra.mxu0 %v1558
    %v2323 = vpop.f32.mrf.mxu0
    %v2324 = vadd.f32 %v1668, %v2323
    %v2325 = vpop.f32.mrf.mxu0
    %v2326 = vadd.f32 %v1668, %v2325
    %2327 = vmatmul.bf16.gmra.mxu0 %v1560
    %v2328 = vpop.f32.mrf.mxu0
    %v2329 = vadd.f32 %v1668, %v2328
    %v2330 = vpop.f32.mrf.mxu0
    %v2331 = vadd.f32 %v1668, %v2330
    %2332 = vmatmul.bf16.gmra.mxu0 %v1562
    %v2333 = vpop.f32.mrf.mxu0
    %v2334 = vadd.f32 %v1668, %v2333
    %v2335 = vpop.f32.mrf.mxu0
    %v2336 = vadd.f32 %v1668, %v2335
    %2337 = vmatmul.bf16.gmra.mxu0 %v1564
    %v2338 = vpop.f32.mrf.mxu0
    %v2339 = vadd.f32 %v1668, %v2338
    %v2340 = vpop.f32.mrf.mxu0
    %2341 = vdwg.mxu0
    %2342 = vmatpush.bf16.msra.mxu0 %v2009
    %2343 = vmatpush.bf16.msra.mxu0 %v2004
    %2344 = vmatpush.bf16.msra.mxu0 %v1999
    %2345 = vmatpush.bf16.msra.mxu0 %v1994
    %2346 = vmatpush.bf16.msra.mxu0 %v1989
    %2347 = vmatpush.bf16.msra.mxu0 %v1984
    %2348 = vmatpush.bf16.msra.mxu0 %v1979
    %2349 = vmatpush.bf16.msra.mxu0 %v1974
    %2350 = vmatmul.bf16.gmra.mxu0 %v1559
    %v2351 = vpop.f32.mrf.mxu0
    %v2352 = vadd.f32 %v2324, %v2351
    %v2353 = vpop.f32.mrf.mxu0
    %v2354 = vadd.f32 %v2326, %v2353
    %2355 = vmatmul.bf16.gmra.mxu0 %v1561
    %v2356 = vpop.f32.mrf.mxu0
    %v2357 = vadd.f32 %v2329, %v2356
    %v2358 = vpop.f32.mrf.mxu0
    %v2359 = vadd.f32 %v2331, %v2358
    %2360 = vmatmul.bf16.gmra.mxu0 %v1563
    %v2361 = vpop.f32.mrf.mxu0
    %v2362 = vadd.f32 %v2334, %v2361
    %v2363 = vpop.f32.mrf.mxu0
    %v2364 = vadd.f32 %v2336, %v2363
    %2365 = vmatmul.bf16.gmra.mxu0 %v1565
    %v2366 = vpop.f32.mrf.mxu0
    %v2367 = vadd.f32 %v2339, %v2366
    %v2368 = vpop.f32.mrf.mxu0
    %2369 = vdwg.mxu0
    %2370 = vst [vmem:[#allocation2] sm:$0xff] %v2128
    %2371 = vst [vmem:[#allocation2 + $0x8] sm:$0xff] %v2184
    %2372 = vst [vmem:[#allocation2 + $0x10] sm:$0xff] %v2240
    %2373 = vst [vmem:[#allocation2 + $0x18] sm:$0xff] %v2296
    %2374 = vst.msk [vmem:[#allocation2 + $0x20] sm:$0xff] %vm511, %v2352
    %2375 = vst [vmem:[#allocation2 + $0x28] sm:$0xff] %v2130
    %2376 = vst [vmem:[#allocation2 + $0x30] sm:$0xff] %v2186
    %2377 = vst [vmem:[#allocation2 + $0x38] sm:$0xff] %v2242
    %2378 = vst [vmem:[#allocation2 + $0x40] sm:$0xff] %v2298
    %2379 = vst.msk [vmem:[#allocation2 + $0x48] sm:$0xff] %vm511, %v2354
    %2380 = vst [vmem:[#allocation2 + $0x50] sm:$0xff] %v2133
    %2381 = vst [vmem:[#allocation2 + $0x58] sm:$0xff] %v2189
    %2382 = vst [vmem:[#allocation2 + $0x60] sm:$0xff] %v2245
    %2383 = vst [vmem:[#allocation2 + $0x68] sm:$0xff] %v2301
    %2384 = vst.msk [vmem:[#allocation2 + $0x70] sm:$0xff] %vm511, %v2357
    %2385 = vst [vmem:[#allocation2 + $0x78] sm:$0xff] %v2135
    %2386 = vst [vmem:[#allocation2 + $0x80] sm:$0xff] %v2191
    %2387 = vst [vmem:[#allocation2 + $0x88] sm:$0xff] %v2247
    %2388 = vst [vmem:[#allocation2 + $0x90] sm:$0xff] %v2303
    %2389 = vst.msk [vmem:[#allocation2 + $0x98] sm:$0xff] %vm511, %v2359
    %2390 = vst [vmem:[#allocation2 + $0xa0] sm:$0xff] %v2138
    %2391 = vst [vmem:[#allocation2 + $0xa8] sm:$0xff] %v2194
    %2392 = vst [vmem:[#allocation2 + $0xb0] sm:$0xff] %v2250
    %2393 = vst [vmem:[#allocation2 + $0xb8] sm:$0xff] %v2306
    %2394 = vst.msk [vmem:[#allocation2 + $0xc0] sm:$0xff] %vm511, %v2362
    %2395 = vst [vmem:[#allocation2 + $0xc8] sm:$0xff] %v2140
    %2396 = vst [vmem:[#allocation2 + $0xd0] sm:$0xff] %v2196
    %2397 = vst [vmem:[#allocation2 + $0xd8] sm:$0xff] %v2252
    %2398 = vst [vmem:[#allocation2 + $0xe0] sm:$0xff] %v2308
    %2399 = vst.msk [vmem:[#allocation2 + $0xe8] sm:$0xff] %vm511, %v2364
    %2400 = vst [vmem:[#allocation2 + $0xf0] sm:$0xff] %v2143
    %2401 = vst [vmem:[#allocation2 + $0xf8] sm:$0xff] %v2199
    %2402 = vst [vmem:[#allocation2 + $0x100] sm:$0xff] %v2255
    %2403 = vst [vmem:[#allocation2 + $0x108] sm:$0xff] %v2311
    %2404 = vst.msk [vmem:[#allocation2 + $0x110] sm:$0xff] %vm511, %v2367
    // Predicated region
    $region70: #{autoencoder_forward.1} parent=1 // pred_check
      _
    $region71: #{autoencoder_forward.1} parent=1 // pred_check_branch
      %2406 = sbr.rel (0) target = $region73
    $region72: #{autoencoder_forward.1} parent=1 // pred_region
      _
    $region73: #{autoencoder_forward.1} parent=1 // pred_fallthru
      _
    // Predicated region
    $region74: #{autoencoder_forward.1} parent=1 // pred_check
      _
    $region75: #{autoencoder_forward.1} parent=1 // pred_check_branch
      %2408 = sbr.rel (0) target = $region77
    $region76: #{autoencoder_forward.1} parent=1 // pred_region
      %2410 = vsyncadd [#allocation3], 0
      %s2411 = sshll.u32 [#allocation2], 4
      %s2412 = int_to_ptr.vmem [resolvable:$true] %s2411
      %s2413 = sshll.u32 %s18, 4
      %s2414 = int_to_ptr.hbm [resolvable:$true] %s2413
      %2419 = dma.vmem_to_hbm [thread:$0]  %s2412, 4480, %s2414, [#allocation3], 640, 640, 40
    $region77: #{autoencoder_forward.1} parent=1 // pred_fallthru
      _
    // Predicated region
    $region78: #{autoencoder_forward.1} parent=1 // pred_check
      _
    $region79: #{autoencoder_forward.1} parent=1 // pred_check_branch
      %2421 = sbr.rel (0) target = $region81
    $region80: #{autoencoder_forward.1} parent=1 // pred_region
      _
    $region81: #{autoencoder_forward.1} parent=1 // pred_fallthru
      _
    // Predicated region
    $region82: #{autoencoder_forward.1} parent=1 // pred_check
      _
    $region83: #{autoencoder_forward.1} parent=1 // pred_check_branch
      %2423 = sbr.rel (0) target = $region85
    $region84: #{autoencoder_forward.1} parent=1 // pred_region
      %2425 = dma.done [#allocation3], 4480
    $region85: #{autoencoder_forward.1} parent=1 // pred_fallthru
      _
    %2426 = vsyncpa [#allocation3], 1

</llo_original>
